<compile_context>
chip_gen: v7x
topology: tpu7x:2x2x1
jax: 0.10.0
libtpu: 0.0.40
codegen_flags: <defaults>
</compile_context>

<pallas_src>
import jax
import jax.numpy as jnp
from jax.experimental import pallas as pl
from jax.experimental.pallas import tpu as pltpu

LANE = 128
SUBLANE = 8
Z_DTYPE = jnp.bfloat16       # conv-output storage dtype (BN stats stay exact f32)


def _round_up(x, m):
    return (x + m - 1) // m * m


def _m_tiling(m):
    """Matmul M tile (multiple of 8, <= 512) and padded M extent."""
    tm = 512 if m >= 512 else _round_up(m, SUBLANE)
    return tm, _round_up(m, tm)


def _ew_tiling(m_pad, tm_base, cap=2048):
    """Larger M tile for the HBM-bound elementwise kernels."""
    t = tm_base
    while t * 2 <= cap and m_pad % (t * 2) == 0:
        t *= 2
    return t


def _k_tiling(k_true, tm, tn, budget_bytes=4 * 1024 * 1024):
    """K padded to a lane multiple; tk = largest 128-multiple divisor of K_pad
    whose double-buffered bf16 tiles (patches + weights) fit the budget."""
    k_pad = _round_up(k_true, LANE)
    q = k_pad // LANE
    best = 1
    for d in range(1, q + 1):
        if q % d == 0 and 2 * 2 * (d * LANE) * (tm + tn) <= budget_bytes:
            best = d
    return best * LANE, k_pad


def _cn_tiling(c_total):
    """Output-channel tile: 256 (v6e/v7x MXU width) when it divides, else 128."""
    return 256 if c_total % 256 == 0 else LANE


# ----------------------------- Pallas kernels -------------------------------

def _silu(y):
    # exp and the reciprocal both ride the EUP slot; keeps the VALU free.
    return y * pl.reciprocal(1.0 + jnp.exp(-y), approx=True)


def _matmul_stats_kernel_1k(p_ref, w_ref, o_ref, sum_ref, sq_ref):
    """Single-K-step conv matmul with fused per-channel sum / sum-of-squares."""
    z = jnp.dot(p_ref[...], w_ref[...], preferred_element_type=jnp.float32)
    o_ref[...] = z.astype(o_ref.dtype)
    sum_ref[...] = jnp.sum(z, axis=0, keepdims=True)[None]
    sq_ref[...] = jnp.sum(z * z, axis=0, keepdims=True)[None]


def _matmul_stats_kernel_nk(p_ref, w_ref, o_ref, sum_ref, sq_ref, acc_ref):
    """Multi-K-step conv matmul (f32 VMEM accumulator) with fused stats."""
    @pl.when(pl.program_id(2) == 0)
    def _init():
        acc_ref[...] = jnp.zeros_like(acc_ref)

    acc_ref[...] += jnp.dot(p_ref[...], w_ref[...],
                            preferred_element_type=jnp.float32)

    @pl.when(pl.program_id(2) == pl.num_programs(2) - 1)
    def _done():
        z = acc_ref[...]
        o_ref[...] = z.astype(o_ref.dtype)
        sum_ref[...] = jnp.sum(z, axis=0, keepdims=True)[None]
        sq_ref[...] = jnp.sum(z * z, axis=0, keepdims=True)[None]


def _affine_silu_kernel(x_ref, scale_ref, shift_ref, o_ref):
    """Fused BatchNorm affine (precomputed per-channel scale/shift) + SiLU."""
    y = x_ref[...].astype(jnp.float32) * scale_ref[...] + shift_ref[...]
    o_ref[...] = _silu(y).astype(o_ref.dtype)


def _residual_bn_silu_kernel(a_ref, sa_ref, ba_ref, b_ref, sb_ref, bb_ref, o_ref):
    """Fused epilogue: BN(extra) + BN(conv2) + residual add + SiLU."""
    ya = a_ref[...].astype(jnp.float32) * sa_ref[...] + ba_ref[...]
    yb = b_ref[...].astype(jnp.float32) * sb_ref[...] + bb_ref[...]
    o_ref[...] = _silu(ya + yb).astype(o_ref.dtype)


# --------------------------- pallas_call wrappers ----------------------------

def pallas_conv_matmul(patches_bf16, w_bf16, tm, tk, tn):
    """patches[M_pad,K_pad] @ W[K_pad,C_tot] with fused per-M-tile channel
    stats.  Returns z [M_pad,C_tot] (Z_DTYPE) and per-tile sum/sumsq
    [gi,1,C_tot] f32 (reduced over gi in JAX; padded rows are zero so the sums
    equal sums over the true rows)."""
    m_pad, k_pad = patches_bf16.shape
    c_tot = w_bf16.shape[1]
    gi, gj, gk = m_pad // tm, c_tot // tn, k_pad // tk
    z_bytes = jnp.dtype(Z_DTYPE).itemsize

    out_shape = (jax.ShapeDtypeStruct((m_pad, c_tot), Z_DTYPE),
                 jax.ShapeDtypeStruct((gi, 1, c_tot), jnp.float32),
                 jax.ShapeDtypeStruct((gi, 1, c_tot), jnp.float32))

    if gk == 1:
        # single K step: no accumulator scratch, no init/finalize branches.
        grid = (gi, gj)
        in_specs = [pl.BlockSpec((tm, tk), lambda i, j: (i, 0)),
                    pl.BlockSpec((tk, tn), lambda i, j: (0, j))]
        out_specs = (pl.BlockSpec((tm, tn), lambda i, j: (i, j)),
                     pl.BlockSpec((1, 1, tn), lambda i, j: (i, 0, j)),
                     pl.BlockSpec((1, 1, tn), lambda i, j: (i, 0, j)))
        kernel = _matmul_stats_kernel_1k
        scratch = []
        dims = ("parallel", "parallel")
    else:
        grid = (gi, gj, gk)
        in_specs = [pl.BlockSpec((tm, tk), lambda i, j, k: (i, k)),
                    pl.BlockSpec((tk, tn), lambda i, j, k: (k, j))]
        out_specs = (pl.BlockSpec((tm, tn), lambda i, j, k: (i, j)),
                     pl.BlockSpec((1, 1, tn), lambda i, j, k: (i, 0, j)),
                     pl.BlockSpec((1, 1, tn), lambda i, j, k: (i, 0, j)))
        kernel = _matmul_stats_kernel_nk
        scratch = [pltpu.VMEM((tm, tn), jnp.float32)]
        dims = ("parallel", "parallel", "arbitrary")

    return pl.pallas_call(
        kernel,
        out_shape=out_shape,
        grid=grid,
        in_specs=in_specs,
        out_specs=out_specs,
        scratch_shapes=scratch,
        compiler_params=pltpu.CompilerParams(
            dimension_semantics=dims,
            vmem_limit_bytes=32 * 1024 * 1024,
        ),
        cost_estimate=pl.CostEstimate(
            flops=2 * m_pad * k_pad * c_tot,
            transcendentals=0,
            bytes_accessed=(m_pad * k_pad * 2 * gj + k_pad * c_tot * 2 * gi
                            + m_pad * c_tot * z_bytes),
        ),
    )(patches_bf16, w_bf16)


def _tile_spec(tm, c_pad, col):
    # reads a (tm, c_pad) column-block `col` of a wider lane-dense array,
    # so slicing the fused [conv1 | shortcut] output needs no XLA copy.
    return pl.BlockSpec((tm, c_pad), lambda i: (i, col))


def _row_spec(c_pad):
    return pl.BlockSpec((1, c_pad), lambda i: (0, 0))


def pallas_affine_silu(z, col, scale, shift, tm, c_pad, out_dtype):
    m_pad = z.shape[0]
    return pl.pallas_call(
        _affine_silu_kernel,
        out_shape=jax.ShapeDtypeStruct((m_pad, c_pad), out_dtype),
        grid=(m_pad // tm,),
        in_specs=[_tile_spec(tm, c_pad, col), _row_spec(c_pad), _row_spec(c_pad)],
        out_specs=_tile_spec(tm, c_pad, 0),
        compiler_params=pltpu.CompilerParams(
            dimension_semantics=("parallel",),
            vmem_limit_bytes=32 * 1024 * 1024),
    )(z, scale, shift)


def pallas_residual_bn_silu(a, a_col, sa, ba, b, b_col, sb, bb, tm, c_pad,
                            out_dtype):
    m_pad = a.shape[0]
    return pl.pallas_call(
        _residual_bn_silu_kernel,
        out_shape=jax.ShapeDtypeStruct((m_pad, c_pad), out_dtype),
        grid=(m_pad // tm,),
        in_specs=[_tile_spec(tm, c_pad, a_col), _row_spec(c_pad), _row_spec(c_pad),
                  _tile_spec(tm, c_pad, b_col), _row_spec(c_pad), _row_spec(c_pad)],
        out_specs=_tile_spec(tm, c_pad, 0),
        compiler_params=pltpu.CompilerParams(
            dimension_semantics=("parallel",),
            vmem_limit_bytes=32 * 1024 * 1024),
    )(a, sa, ba, b, sb, bb)


# ------------------------------- JAX glue ------------------------------------

def _im2col(x_nhwc, kh, kw, stride, padding):
    n, h, w, cin = x_nhwc.shape
    xp = jnp.pad(x_nhwc, ((0, 0), (padding, padding), (padding, padding), (0, 0)))
    oh = (h + 2 * padding - kh) // stride + 1
    ow = (w + 2 * padding - kw) // stride + 1
    cols = []
    for i in range(kh):
        for j in range(kw):
            cols.append(xp[:, i:i + stride * oh:stride, j:j + stride * ow:stride, :])
    p = jnp.stack(cols, axis=3)                     # [N, OH, OW, KH*KW, Cin]
    return p.reshape(n * oh * ow, kh * kw * cin), oh, ow


def _flatten_conv_weight(w_pt):
    # [Cout, Cin, KH, KW] -> [KH*KW*Cin, Cout]; tap order matches _im2col.
    cout, cin, kh, kw = w_pt.shape
    return jnp.transpose(w_pt, (2, 3, 1, 0)).reshape(kh * kw * cin, cout)


def _bn_scale_shift(sums, sumsqs, m_true, gamma_row, beta_row, eps):
    """Per-channel affine (scale, shift) for training-mode BatchNorm."""
    mean = sums / m_true
    var = jnp.maximum(sumsqs / m_true - mean * mean, 0.0)   # biased, like PyTorch norm path
    scale = gamma_row * jax.lax.rsqrt(var + eps)
    shift = beta_row - mean * scale
    return scale, shift


def resnet_down_block(x_nchw, params, stride, padding, eps=1e-5):
    w_e, w1, w2 = params["w_e"], params["w1"], params["w2"]
    cout, cin = w1.shape[0], w1.shape[1]
    ke, k1, k2 = w_e.shape[2], w1.shape[2], w2.shape[2]
    c_pad = _round_up(cout, LANE)

    def _row(p):   # pad per-channel BN params to the lane-dense channel count
        return jnp.pad(p.reshape(1, -1).astype(jnp.float32),
                       ((0, 0), (0, c_pad - cout)))

    # channels-last bf16 activations feed the MXU (f32 accumulation inside).
    x_nhwc = jnp.transpose(x_nchw, (0, 2, 3, 1)).astype(jnp.bfloat16)
    n = x_nhwc.shape[0]

    # A 1x1/pad-0 shortcut with the same stride samples exactly conv1's center
    # tap when conv1 has an odd kernel and "same"-style padding, so its weights
    # can ride along as extra output channels of conv1's matmul.
    fuse_shortcut = (ke == 1 and padding[0] == 0 and stride[0] == stride[1]
                     and k1 % 2 == 1 and padding[1] == (k1 - 1) // 2)

    # ---- conv1 (+ fused shortcut): im2col matmul with fused BN stats --------
    patches1, oh1, ow1 = _im2col(x_nhwc, k1, k1, stride[1], padding[1])
    m1, k1_true = patches1.shape
    tm1, m1_pad = _m_tiling(m1)
    c_tot1 = 2 * c_pad if fuse_shortcut else c_pad
    tn1 = _cn_tiling(c_tot1)
    tk1, k1_pad = _k_tiling(k1_true, tm1, tn1)
    patches1 = jnp.pad(patches1, ((0, m1_pad - m1), (0, k1_pad - k1_true)))

    w1_mat = jnp.pad(_flatten_conv_weight(w1).astype(jnp.float32),
                     ((0, k1_pad - k1_true), (0, c_pad - cout)))
    if fuse_shortcut:
        center = ((k1 // 2) * k1 + (k1 // 2)) * cin      # center-tap K offset
        we_mat = jnp.zeros((k1_pad, c_pad), jnp.float32)
        we_mat = we_mat.at[center:center + cin, :cout].set(
            w_e.reshape(cout, cin).T.astype(jnp.float32))
        w_mat = jnp.concatenate([w1_mat, we_mat], axis=1)   # [K, conv1 | shortcut]
    else:
        w_mat = w1_mat

    z1, s1p, q1p = pallas_conv_matmul(patches1.astype(jnp.bfloat16),
                                      w_mat.astype(jnp.bfloat16), tm1, tk1, tn1)
    sums1 = jnp.sum(s1p, axis=0)        # [1, c_tot1]  (tiny reduction in JAX)
    sqs1 = jnp.sum(q1p, axis=0)

    scale1, shift1 = _bn_scale_shift(sums1[:, :c_pad], sqs1[:, :c_pad], m1,
                                     _row(params["g1"]), _row(params["be1"]), eps)

    # fused BN affine + SiLU on conv1's half of z1 (bf16 in / bf16 out)
    tm_ew1 = _ew_tiling(m1_pad, tm1)
    h = pallas_affine_silu(z1, 0, scale1, shift1, tm_ew1, c_pad, jnp.bfloat16)

    # ---- shortcut branch source + stats --------------------------------------
    if fuse_shortcut:
        z_e, e_col, m_e, m_e_pad = z1, 1, m1, m1_pad
        sums_e, sqs_e = sums1[:, c_pad:], sqs1[:, c_pad:]
    else:
        patches_e, _, _ = _im2col(x_nhwc, ke, ke, stride[0], padding[0])
        m_e, ke_true = patches_e.shape
        tm_e, m_e_pad = _m_tiling(m_e)
        tn_e = _cn_tiling(c_pad)
        tk_e, ke_pad = _k_tiling(ke_true, tm_e, tn_e)
        patches_e = jnp.pad(patches_e, ((0, m_e_pad - m_e), (0, ke_pad - ke_true)))
        we_mat = jnp.pad(_flatten_conv_weight(w_e).astype(jnp.float32),
                         ((0, ke_pad - ke_true), (0, c_pad - cout)))
        z_e, sep, qep = pallas_conv_matmul(patches_e.astype(jnp.bfloat16),
                                           we_mat.astype(jnp.bfloat16),
                                           tm_e, tk_e, tn_e)
        e_col = 0
        sums_e, sqs_e = jnp.sum(sep, axis=0), jnp.sum(qep, axis=0)

    scale_e, shift_e = _bn_scale_shift(sums_e, sqs_e, m_e,
                                       _row(params["g_e"]), _row(params["be_e"]),
                                       eps)

    # ---- conv2 on the true (un-padded) channels of h -------------------------
    h_nhwc = h[:m1, :cout].reshape(n, oh1, ow1, cout)
    patches2, oh2, ow2 = _im2col(h_nhwc, k2, k2, stride[2], padding[2])
    m2, k2_true = patches2.shape
    tm2, m2_pad = _m_tiling(m2)
    tn2 = _cn_tiling(c_pad)
    tk2, k2_pad = _k_tiling(k2_true, tm2, tn2)
    patches2 = jnp.pad(patches2, ((0, m2_pad - m2), (0, k2_pad - k2_true)))
    w2_mat = jnp.pad(_flatten_conv_weight(w2).astype(jnp.float32),
                     ((0, k2_pad - k2_true), (0, c_pad - cout)))
    z2, s2p, q2p = pallas_conv_matmul(patches2.astype(jnp.bfloat16),
                                      w2_mat.astype(jnp.bfloat16), tm2, tk2, tn2)
    scale2, shift2 = _bn_scale_shift(jnp.sum(s2p, axis=0), jnp.sum(q2p, axis=0),
                                     m2, _row(params["g2"]), _row(params["be2"]),
                                     eps)

    # ---- fused epilogue: SiLU(BN(z_e) + BN(z2)) in one pass ------------------
    assert m_e == m2 and m_e_pad == m2_pad, "shortcut/main spatial mismatch"
    tm_ep = _ew_tiling(m2_pad, tm2)
    y = pallas_residual_bn_silu(z_e, e_col, scale_e, shift_e,
                                z2, 0, scale2, shift2, tm_ep, c_pad, jnp.float32)

    # back to NCHW only at the module boundary.
    y = y[:m2, :cout].reshape(n, oh2, ow2, cout)
    return jnp.transpose(y, (0, 3, 1, 2))


# --------------------------------- main ---------------------------------------

if __name__ == "__main__":
    key = jax.random.PRNGKey(0)
    N, Cin, H, W = 2, 4, 16, 16
    Cout = 8
    kernel_size = (1, 3, 3)   # (extra, conv1, conv2)
    stride = (2, 2, 1)
    padding = (0, 1, 1)

    ks = jax.random.split(key, 7)
    x = jax.random.normal(ks[0], (N, Cin, H, W), jnp.float32)

    params = {
        # extra (shortcut) conv + BN   (conv bias cancels through training-mode BN)
        "w_e": 0.1 * jax.random.normal(ks[1], (Cout, Cin, kernel_size[0], kernel_size[0]), jnp.float32),
        "b_e": 0.1 * jax.random.normal(ks[2], (Cout,), jnp.float32),
        "g_e": jnp.ones((Cout,), jnp.float32),
        "be_e": jnp.zeros((Cout,), jnp.float32),
        # conv1 + BN
        "w1": 0.1 * jax.random.normal(ks[3], (Cout, Cin, kernel_size[1], kernel_size[1]), jnp.float32),
        "b1": 0.1 * jax.random.normal(ks[4], (Cout,), jnp.float32),
        "g1": jnp.ones((Cout,), jnp.float32),
        "be1": jnp.zeros((Cout,), jnp.float32),
        # conv2 + BN
        "w2": 0.1 * jax.random.normal(ks[5], (Cout, Cout, kernel_size[2], kernel_size[2]), jnp.float32),
        "b2": 0.1 * jax.random.normal(ks[6], (Cout,), jnp.float32),
        "g2": jnp.ones((Cout,), jnp.float32),
        "be2": jnp.zeros((Cout,), jnp.float32),
    }

    fwd = jax.jit(lambda xx, pp: resnet_down_block(xx, pp, stride, padding))
    out = jax.block_until_ready(fwd(x, params))
    assert out.shape == (N, Cout, 8, 8), out.shape
    assert bool(jnp.all(jnp.isfinite(out)))
    print("KERNEL_OK")
</pallas_src>

<mosaic_0001>
module attributes {stable_mosaic.version = 11 : i64} {
  func.func @_affine_silu_kernel(%arg0: i32, %arg1: memref<128x128xbf16, #tpu.memory_space<vmem>>, %arg2: memref<1x128xf32, #tpu.memory_space<vmem>>, %arg3: memref<1x128xf32, #tpu.memory_space<vmem>>, %arg4: memref<128x128xbf16, #tpu.memory_space<vmem>>) attributes {dimension_semantics = [#tpu.dimension_semantics<parallel>], iteration_bounds = array<i64: 1>, scalar_prefetch = 0 : i64, scratch_operands = 0 : i64, tpu.core_type = #tpu.core_type<tc>, window_params = [{transform_indices = @transform_0, window_bounds = array<i64: 128, 128>}, {pipeline_mode = #tpu.pipeline_mode<synchronous>, transform_indices = @transform_1, window_bounds = array<i64: 1, 128>}, {pipeline_mode = #tpu.pipeline_mode<synchronous>, transform_indices = @transform_2, window_bounds = array<i64: 1, 128>}, {transform_indices = @transform_3, window_bounds = array<i64: 128, 128>}]} {
    %c0 = arith.constant 0 : index
    %c0_0 = arith.constant 0 : index
    %0 = vector.load %arg1[%c0, %c0_0] : memref<128x128xbf16, #tpu.memory_space<vmem>>, vector<128x128xbf16>
    %1 = arith.extf %0 : vector<128x128xbf16> to vector<128x128xf32>
    %c0_1 = arith.constant 0 : index
    %c0_2 = arith.constant 0 : index
    %2 = vector.load %arg2[%c0_1, %c0_2] : memref<1x128xf32, #tpu.memory_space<vmem>>, vector<1x128xf32>
    %3 = vector.broadcast %2 : vector<1x128xf32> to vector<128x128xf32>
    %4 = arith.mulf %1, %3 : vector<128x128xf32>
    %c0_3 = arith.constant 0 : index
    %c0_4 = arith.constant 0 : index
    %5 = vector.load %arg3[%c0_3, %c0_4] : memref<1x128xf32, #tpu.memory_space<vmem>>, vector<1x128xf32>
    %6 = vector.broadcast %5 : vector<1x128xf32> to vector<128x128xf32>
    %7 = arith.addf %4, %6 : vector<128x128xf32>
    %cst = arith.constant 0.000000e+00 : f32
    %8 = vector.broadcast %cst : f32 to vector<128x128xf32>
    %9 = arith.subf %8, %7 : vector<128x128xf32>
    %10 = math.exp %9 : vector<128x128xf32>
    %cst_5 = arith.constant 1.000000e+00 : f32
    %11 = vector.broadcast %cst_5 : f32 to vector<128x128xf32>
    %12 = arith.addf %11, %10 : vector<128x128xf32>
    %13 = tpu.reciprocal %12 {approx = true} : vector<128x128xf32> -> vector<128x128xf32>
    %14 = arith.mulf %7, %13 : vector<128x128xf32>
    %15 = arith.truncf %14 : vector<128x128xf32> to vector<128x128xbf16>
    %c0_6 = arith.constant 0 : index
    %c0_7 = arith.constant 0 : index
    %16 = vector.load %arg4[%c0_6, %c0_7] : memref<128x128xbf16, #tpu.memory_space<vmem>>, vector<128x128xbf16>
    tpu.vector_store %arg4[%c0_6, %c0_7], %15 {strides = array<i32>} : memref<128x128xbf16, #tpu.memory_space<vmem>>, vector<128x128xbf16>,
    return
  }
  func.func @transform_0(%arg0: i32) -> (i32, i32) {
    %c0_i32 = arith.constant 0 : i32
    %c0_i32_0 = arith.constant 0 : i32
    return %arg0, %c0_i32 : i32, i32
  }
  func.func @transform_1(%arg0: i32) -> (i32, i32) {
    %c0_i32 = arith.constant 0 : i32
    %c0_i32_0 = arith.constant 0 : i32
    %c0_i32_1 = arith.constant 0 : i32
    return %c0_i32, %c0_i32_0 : i32, i32
  }
  func.func @transform_2(%arg0: i32) -> (i32, i32) {
    %c0_i32 = arith.constant 0 : i32
    %c0_i32_0 = arith.constant 0 : i32
    %c0_i32_1 = arith.constant 0 : i32
    return %c0_i32, %c0_i32_0 : i32, i32
  }
  func.func @transform_3(%arg0: i32) -> (i32, i32) {
    %c0_i32 = arith.constant 0 : i32
    %c0_i32_0 = arith.constant 0 : i32
    return %arg0, %c0_i32 : i32, i32
  }
}

module attributes {stable_mosaic.version = 11 : i64} {
  func.func @_matmul_stats_kernel_1k(%arg0: i32, %arg1: i32, %arg2: memref<128x128xbf16, #tpu.memory_space<vmem>>, %arg3: memref<128x256xbf16, #tpu.memory_space<vmem>>, %arg4: memref<128x256xbf16, #tpu.memory_space<vmem>>, %arg5: memref<1x1x256xf32, #tpu.memory_space<vmem>>, %arg6: memref<1x1x256xf32, #tpu.memory_space<vmem>>) attributes {dimension_semantics = [#tpu.dimension_semantics<parallel>, #tpu.dimension_semantics<parallel>], iteration_bounds = array<i64: 1, 1>, scalar_prefetch = 0 : i64, scratch_operands = 0 : i64, tpu.core_type = #tpu.core_type<tc>, window_params = [{transform_indices = @transform_0, window_bounds = array<i64: 128, 128>}, {transform_indices = @transform_1, window_bounds = array<i64: 128, 256>}, {transform_indices = @transform_2, window_bounds = array<i64: 128, 256>}, {transform_indices = @transform_3, window_bounds = array<i64: 1, 1, 256>}, {transform_indices = @transform_4, window_bounds = array<i64: 1, 1, 256>}]} {
    %c0 = arith.constant 0 : index
    %c0_0 = arith.constant 0 : index
    %0 = vector.load %arg2[%c0, %c0_0] : memref<128x128xbf16, #tpu.memory_space<vmem>>, vector<128x128xbf16>
    %c0_1 = arith.constant 0 : index
    %c0_2 = arith.constant 0 : index
    %1 = vector.load %arg3[%c0_1, %c0_2] : memref<128x256xbf16, #tpu.memory_space<vmem>>, vector<128x256xbf16>
    %cst = arith.constant dense<0.000000e+00> : vector<128x256xf32>
    %2 = tpu.matmul %0, %1, %cst {dimension_numbers = #tpu.dot_dimension_numbers<[1], [0], [0], [1], [0, 0, 1, 1], [], []>} : vector<128x128xbf16>, vector<128x256xbf16>, vector<128x256xf32> -> vector<128x256xf32>
    %3 = arith.truncf %2 : vector<128x256xf32> to vector<128x256xbf16>
    %c0_3 = arith.constant 0 : index
    %c0_4 = arith.constant 0 : index
    %4 = vector.load %arg4[%c0_3, %c0_4] : memref<128x256xbf16, #tpu.memory_space<vmem>>, vector<128x256xbf16>
    tpu.vector_store %arg4[%c0_3, %c0_4], %3 {strides = array<i32>} : memref<128x256xbf16, #tpu.memory_space<vmem>>, vector<128x256xbf16>,
    %cst_5 = arith.constant dense<0.000000e+00> : vector<256xf32>
    %5 = vector.multi_reduction <add>, %2, %cst_5 [0] : vector<128x256xf32> to vector<256xf32>
    %6 = vector.shape_cast %5 : vector<256xf32> to vector<1x256xf32>
    %7 = vector.shape_cast %6 : vector<1x256xf32> to vector<1x1x256xf32>
    %c0_6 = arith.constant 0 : index
    %c0_7 = arith.constant 0 : index
    %c0_8 = arith.constant 0 : index
    %8 = vector.load %arg5[%c0_6, %c0_7, %c0_8] : memref<1x1x256xf32, #tpu.memory_space<vmem>>, vector<1x1x256xf32>
    tpu.vector_store %arg5[%c0_6, %c0_7, %c0_8], %7 {strides = array<i32>} : memref<1x1x256xf32, #tpu.memory_space<vmem>>, vector<1x1x256xf32>,
    %9 = arith.mulf %2, %2 : vector<128x256xf32>
    %cst_9 = arith.constant dense<0.000000e+00> : vector<256xf32>
    %10 = vector.multi_reduction <add>, %9, %cst_9 [0] : vector<128x256xf32> to vector<256xf32>
    %11 = vector.shape_cast %10 : vector<256xf32> to vector<1x256xf32>
    %12 = vector.shape_cast %11 : vector<1x256xf32> to vector<1x1x256xf32>
    %c0_10 = arith.constant 0 : index
    %c0_11 = arith.constant 0 : index
    %c0_12 = arith.constant 0 : index
    %13 = vector.load %arg6[%c0_10, %c0_11, %c0_12] : memref<1x1x256xf32, #tpu.memory_space<vmem>>, vector<1x1x256xf32>
    tpu.vector_store %arg6[%c0_10, %c0_11, %c0_12], %12 {strides = array<i32>} : memref<1x1x256xf32, #tpu.memory_space<vmem>>, vector<1x1x256xf32>,
    return
  }
  func.func @transform_0(%arg0: i32, %arg1: i32) -> (i32, i32) {
    %c0_i32 = arith.constant 0 : i32
    %c0_i32_0 = arith.constant 0 : i32
    return %arg0, %c0_i32 : i32, i32
  }
  func.func @transform_1(%arg0: i32, %arg1: i32) -> (i32, i32) {
    %c0_i32 = arith.constant 0 : i32
    %c0_i32_0 = arith.constant 0 : i32
    return %c0_i32, %arg1 : i32, i32
  }
  func.func @transform_2(%arg0: i32, %arg1: i32) -> (i32, i32) {
    %c0_i32 = arith.constant 0 : i32
    return %arg0, %arg1 : i32, i32
  }
  func.func @transform_3(%arg0: i32, %arg1: i32) -> (i32, i32, i32) {
    %c0_i32 = arith.constant 0 : i32
    %c0_i32_0 = arith.constant 0 : i32
    return %arg0, %c0_i32, %arg1 : i32, i32, i32
  }
  func.func @transform_4(%arg0: i32, %arg1: i32) -> (i32, i32, i32) {
    %c0_i32 = arith.constant 0 : i32
    %c0_i32_0 = arith.constant 0 : i32
    return %arg0, %c0_i32, %arg1 : i32, i32, i32
  }
}

module attributes {stable_mosaic.version = 11 : i64} {
  func.func @_matmul_stats_kernel_1k(%arg0: i32, %arg1: i32, %arg2: memref<128x128xbf16, #tpu.memory_space<vmem>>, %arg3: memref<128x128xbf16, #tpu.memory_space<vmem>>, %arg4: memref<128x128xbf16, #tpu.memory_space<vmem>>, %arg5: memref<1x1x128xf32, #tpu.memory_space<vmem>>, %arg6: memref<1x1x128xf32, #tpu.memory_space<vmem>>) attributes {dimension_semantics = [#tpu.dimension_semantics<parallel>, #tpu.dimension_semantics<parallel>], iteration_bounds = array<i64: 1, 1>, scalar_prefetch = 0 : i64, scratch_operands = 0 : i64, tpu.core_type = #tpu.core_type<tc>, window_params = [{transform_indices = @transform_0, window_bounds = array<i64: 128, 128>}, {transform_indices = @transform_1, window_bounds = array<i64: 128, 128>}, {transform_indices = @transform_2, window_bounds = array<i64: 128, 128>}, {transform_indices = @transform_3, window_bounds = array<i64: 1, 1, 128>}, {transform_indices = @transform_4, window_bounds = array<i64: 1, 1, 128>}]} {
    %c0 = arith.constant 0 : index
    %c0_0 = arith.constant 0 : index
    %0 = vector.load %arg2[%c0, %c0_0] : memref<128x128xbf16, #tpu.memory_space<vmem>>, vector<128x128xbf16>
    %c0_1 = arith.constant 0 : index
    %c0_2 = arith.constant 0 : index
    %1 = vector.load %arg3[%c0_1, %c0_2] : memref<128x128xbf16, #tpu.memory_space<vmem>>, vector<128x128xbf16>
    %cst = arith.constant dense<0.000000e+00> : vector<128x128xf32>
    %2 = tpu.matmul %0, %1, %cst {dimension_numbers = #tpu.dot_dimension_numbers<[1], [0], [0], [1], [0, 0, 1, 1], [], []>} : vector<128x128xbf16>, vector<128x128xbf16>, vector<128x128xf32> -> vector<128x128xf32>
    %3 = arith.truncf %2 : vector<128x128xf32> to vector<128x128xbf16>
    %c0_3 = arith.constant 0 : index
    %c0_4 = arith.constant 0 : index
    %4 = vector.load %arg4[%c0_3, %c0_4] : memref<128x128xbf16, #tpu.memory_space<vmem>>, vector<128x128xbf16>
    tpu.vector_store %arg4[%c0_3, %c0_4], %3 {strides = array<i32>} : memref<128x128xbf16, #tpu.memory_space<vmem>>, vector<128x128xbf16>,
    %cst_5 = arith.constant dense<0.000000e+00> : vector<128xf32>
    %5 = vector.multi_reduction <add>, %2, %cst_5 [0] : vector<128x128xf32> to vector<128xf32>
    %6 = vector.shape_cast %5 : vector<128xf32> to vector<1x128xf32>
    %7 = vector.shape_cast %6 : vector<1x128xf32> to vector<1x1x128xf32>
    %c0_6 = arith.constant 0 : index
    %c0_7 = arith.constant 0 : index
    %c0_8 = arith.constant 0 : index
    %8 = vector.load %arg5[%c0_6, %c0_7, %c0_8] : memref<1x1x128xf32, #tpu.memory_space<vmem>>, vector<1x1x128xf32>
    tpu.vector_store %arg5[%c0_6, %c0_7, %c0_8], %7 {strides = array<i32>} : memref<1x1x128xf32, #tpu.memory_space<vmem>>, vector<1x1x128xf32>,
    %9 = arith.mulf %2, %2 : vector<128x128xf32>
    %cst_9 = arith.constant dense<0.000000e+00> : vector<128xf32>
    %10 = vector.multi_reduction <add>, %9, %cst_9 [0] : vector<128x128xf32> to vector<128xf32>
    %11 = vector.shape_cast %10 : vector<128xf32> to vector<1x128xf32>
    %12 = vector.shape_cast %11 : vector<1x128xf32> to vector<1x1x128xf32>
    %c0_10 = arith.constant 0 : index
    %c0_11 = arith.constant 0 : index
    %c0_12 = arith.constant 0 : index
    %13 = vector.load %arg6[%c0_10, %c0_11, %c0_12] : memref<1x1x128xf32, #tpu.memory_space<vmem>>, vector<1x1x128xf32>
    tpu.vector_store %arg6[%c0_10, %c0_11, %c0_12], %12 {strides = array<i32>} : memref<1x1x128xf32, #tpu.memory_space<vmem>>, vector<1x1x128xf32>,
    return
  }
  func.func @transform_0(%arg0: i32, %arg1: i32) -> (i32, i32) {
    %c0_i32 = arith.constant 0 : i32
    %c0_i32_0 = arith.constant 0 : i32
    return %arg0, %c0_i32 : i32, i32
  }
  func.func @transform_1(%arg0: i32, %arg1: i32) -> (i32, i32) {
    %c0_i32 = arith.constant 0 : i32
    %c0_i32_0 = arith.constant 0 : i32
    return %c0_i32, %arg1 : i32, i32
  }
  func.func @transform_2(%arg0: i32, %arg1: i32) -> (i32, i32) {
    %c0_i32 = arith.constant 0 : i32
    return %arg0, %arg1 : i32, i32
  }
  func.func @transform_3(%arg0: i32, %arg1: i32) -> (i32, i32, i32) {
    %c0_i32 = arith.constant 0 : i32
    %c0_i32_0 = arith.constant 0 : i32
    return %arg0, %c0_i32, %arg1 : i32, i32, i32
  }
  func.func @transform_4(%arg0: i32, %arg1: i32) -> (i32, i32, i32) {
    %c0_i32 = arith.constant 0 : i32
    %c0_i32_0 = arith.constant 0 : i32
    return %arg0, %c0_i32, %arg1 : i32, i32, i32
  }
}

module attributes {stable_mosaic.version = 11 : i64} {
  func.func @_residual_bn_silu_kernel(%arg0: i32, %arg1: memref<128x128xbf16, #tpu.memory_space<vmem>>, %arg2: memref<1x128xf32, #tpu.memory_space<vmem>>, %arg3: memref<1x128xf32, #tpu.memory_space<vmem>>, %arg4: memref<128x128xbf16, #tpu.memory_space<vmem>>, %arg5: memref<1x128xf32, #tpu.memory_space<vmem>>, %arg6: memref<1x128xf32, #tpu.memory_space<vmem>>, %arg7: memref<128x128xf32, #tpu.memory_space<vmem>>) attributes {dimension_semantics = [#tpu.dimension_semantics<parallel>], iteration_bounds = array<i64: 1>, scalar_prefetch = 0 : i64, scratch_operands = 0 : i64, tpu.core_type = #tpu.core_type<tc>, window_params = [{transform_indices = @transform_0, window_bounds = array<i64: 128, 128>}, {pipeline_mode = #tpu.pipeline_mode<synchronous>, transform_indices = @transform_1, window_bounds = array<i64: 1, 128>}, {pipeline_mode = #tpu.pipeline_mode<synchronous>, transform_indices = @transform_2, window_bounds = array<i64: 1, 128>}, {transform_indices = @transform_3, window_bounds = array<i64: 128, 128>}, {pipeline_mode = #tpu.pipeline_mode<synchronous>, transform_indices = @transform_4, window_bounds = array<i64: 1, 128>}, {pipeline_mode = #tpu.pipeline_mode<synchronous>, transform_indices = @transform_5, window_bounds = array<i64: 1, 128>}, {transform_indices = @transform_6, window_bounds = array<i64: 128, 128>}]} {
    %c0 = arith.constant 0 : index
    %c0_0 = arith.constant 0 : index
    %0 = vector.load %arg1[%c0, %c0_0] : memref<128x128xbf16, #tpu.memory_space<vmem>>, vector<128x128xbf16>
    %1 = arith.extf %0 : vector<128x128xbf16> to vector<128x128xf32>
    %c0_1 = arith.constant 0 : index
    %c0_2 = arith.constant 0 : index
    %2 = vector.load %arg2[%c0_1, %c0_2] : memref<1x128xf32, #tpu.memory_space<vmem>>, vector<1x128xf32>
    %3 = vector.broadcast %2 : vector<1x128xf32> to vector<128x128xf32>
    %4 = arith.mulf %1, %3 : vector<128x128xf32>
    %c0_3 = arith.constant 0 : index
    %c0_4 = arith.constant 0 : index
    %5 = vector.load %arg3[%c0_3, %c0_4] : memref<1x128xf32, #tpu.memory_space<vmem>>, vector<1x128xf32>
    %6 = vector.broadcast %5 : vector<1x128xf32> to vector<128x128xf32>
    %7 = arith.addf %4, %6 : vector<128x128xf32>
    %c0_5 = arith.constant 0 : index
    %c0_6 = arith.constant 0 : index
    %8 = vector.load %arg4[%c0_5, %c0_6] : memref<128x128xbf16, #tpu.memory_space<vmem>>, vector<128x128xbf16>
    %9 = arith.extf %8 : vector<128x128xbf16> to vector<128x128xf32>
    %c0_7 = arith.constant 0 : index
    %c0_8 = arith.constant 0 : index
    %10 = vector.load %arg5[%c0_7, %c0_8] : memref<1x128xf32, #tpu.memory_space<vmem>>, vector<1x128xf32>
    %11 = vector.broadcast %10 : vector<1x128xf32> to vector<128x128xf32>
    %12 = arith.mulf %9, %11 : vector<128x128xf32>
    %c0_9 = arith.constant 0 : index
    %c0_10 = arith.constant 0 : index
    %13 = vector.load %arg6[%c0_9, %c0_10] : memref<1x128xf32, #tpu.memory_space<vmem>>, vector<1x128xf32>
    %14 = vector.broadcast %13 : vector<1x128xf32> to vector<128x128xf32>
    %15 = arith.addf %12, %14 : vector<128x128xf32>
    %16 = arith.addf %7, %15 : vector<128x128xf32>
    %cst = arith.constant 0.000000e+00 : f32
    %17 = vector.broadcast %cst : f32 to vector<128x128xf32>
    %18 = arith.subf %17, %16 : vector<128x128xf32>
    %19 = math.exp %18 : vector<128x128xf32>
    %cst_11 = arith.constant 1.000000e+00 : f32
    %20 = vector.broadcast %cst_11 : f32 to vector<128x128xf32>
    %21 = arith.addf %20, %19 : vector<128x128xf32>
    %22 = tpu.reciprocal %21 {approx = true} : vector<128x128xf32> -> vector<128x128xf32>
    %23 = arith.mulf %16, %22 : vector<128x128xf32>
    %c0_12 = arith.constant 0 : index
    %c0_13 = arith.constant 0 : index
    %24 = vector.load %arg7[%c0_12, %c0_13] : memref<128x128xf32, #tpu.memory_space<vmem>>, vector<128x128xf32>
    tpu.vector_store %arg7[%c0_12, %c0_13], %23 {strides = array<i32>} : memref<128x128xf32, #tpu.memory_space<vmem>>, vector<128x128xf32>,
    return
  }
  func.func @transform_0(%arg0: i32) -> (i32, i32) {
    %c1_i32 = arith.constant 1 : i32
    %c0_i32 = arith.constant 0 : i32
    return %arg0, %c1_i32 : i32, i32
  }
  func.func @transform_1(%arg0: i32) -> (i32, i32) {
    %c0_i32 = arith.constant 0 : i32
    %c0_i32_0 = arith.constant 0 : i32
    %c0_i32_1 = arith.constant 0 : i32
    return %c0_i32, %c0_i32_0 : i32, i32
  }
  func.func @transform_2(%arg0: i32) -> (i32, i32) {
    %c0_i32 = arith.constant 0 : i32
    %c0_i32_0 = arith.constant 0 : i32
    %c0_i32_1 = arith.constant 0 : i32
    return %c0_i32, %c0_i32_0 : i32, i32
  }
  func.func @transform_3(%arg0: i32) -> (i32, i32) {
    %c0_i32 = arith.constant 0 : i32
    %c0_i32_0 = arith.constant 0 : i32
    return %arg0, %c0_i32 : i32, i32
  }
  func.func @transform_4(%arg0: i32) -> (i32, i32) {
    %c0_i32 = arith.constant 0 : i32
    %c0_i32_0 = arith.constant 0 : i32
    %c0_i32_1 = arith.constant 0 : i32
    return %c0_i32, %c0_i32_0 : i32, i32
  }
  func.func @transform_5(%arg0: i32) -> (i32, i32) {
    %c0_i32 = arith.constant 0 : i32
    %c0_i32_0 = arith.constant 0 : i32
    %c0_i32_1 = arith.constant 0 : i32
    return %c0_i32, %c0_i32_0 : i32, i32
  }
  func.func @transform_6(%arg0: i32) -> (i32, i32) {
    %c0_i32 = arith.constant 0 : i32
    %c0_i32_0 = arith.constant 0 : i32
    return %arg0, %c0_i32 : i32, i32
  }
}

</mosaic_0001>

<llo_original>
// kernel: _lambda_.5
$region0: #{_lambda_.5}
  #allocation0 [shape = 'u32[]', space=smem, size = 0x4, offset = 0x4, fixed_abs, tag = 'smem constant byte address 0x4 - core index']
  #allocation1 [shape = 'u32[144,128]{1,0:T(1,128)}', space=vmem, size = 0x12000, scoped, tag = 'internal scratch']
  %s0 = inlined_call_operand.vmem [shape: bf16[128,256], index: 0, kind: input, shape index: {}]
  %s1 = inlined_call_operand.vmem [shape: f32[1,128], index: 1, kind: input, shape index: {}]
  %s2 = inlined_call_operand.vmem [shape: f32[1,128], index: 2, kind: input, shape index: {}]
  %s3 = inlined_call_operand.vmem [shape: bf16[128,128], index: 3, kind: output, shape index: {}]
  %s4 = sld [smem:[#allocation0]]
  $region63: #{_lambda_.5} parent=0
    _
  %s6 = ssub.s32 1, %s4
  %s7 = scalar_select 0, %s6, %s4
  $region1: #{_lambda_.5} parent=0
    #allocation2 [shape = 'u8[32768]{0}', space=vmem, size = 0x8000, scoped, tag = 'input window, operand 0, single buffered']
    // Predicated region
    $region2: #{_lambda_.5} parent=1 // pred_check
      _
    $region3: #{_lambda_.5} parent=1 // pred_check_branch
      %9 = sbr.rel (0) target = $region5
    $region4: #{_lambda_.5} parent=1 // pred_region
      // Predicated region
      $region6: #{_lambda_.5} parent=4 // pred_check
        _
      $region7: #{_lambda_.5} parent=4 // pred_check_branch
        %11 = sbr.rel (0) target = $region9
      $region8: #{_lambda_.5} parent=4 // pred_region
        // Predicated region
        $region10: #{_lambda_.5} parent=8 // pred_check
          _
        $region11: #{_lambda_.5} parent=8 // pred_check_branch
          %13 = sbr.rel target = $region13
        $region12: #{_lambda_.5} parent=8 // pred_region
          // Predicated region
          $region25: #{_lambda_.5} parent=12 // pred_check
            _
          $region26: #{_lambda_.5} parent=12 // pred_check_branch
            %58 = sbr.rel (0) target = $region28
          $region27: #{_lambda_.5} parent=12 // pred_region
            loop: start=0, step=1, limit=1
            $region29: #{_lambda_.5} parent=27 // loop_pre_header
              _
            $region30: #{_lambda_.5} parent=27 // loop_header
              %s60 = sphi 0, %s64
              %p61 = scmp.ge.s32.totalorder %s60, 1
              %s65 = sphi %s0, %s0
              %s66 = sphi [#allocation2], [#allocation2]
            $region31: #{_lambda_.5} parent=27 // loop_header_branch
              %63 = sbr.rel (%p61) target = $region35
            $region32: #{_lambda_.5} parent=27 // loop_body
              _
            $region33: #{_lambda_.5} parent=27 // loop_footer
              %s64 = sadd.s32 1, %s60
            $region34: #{_lambda_.5} parent=27 // loop_footer_branch
              %59 = sbr.rel target = $region30
            $region35: #{_lambda_.5} parent=27 // loop_exit
              _
            loop: start=0, step=1, limit=1
            $region36: #{_lambda_.5} parent=27 // loop_pre_header
              _
            $region37: #{_lambda_.5} parent=27 // loop_header
              %s69 = sphi 0, %s73
              %p70 = scmp.ge.s32.totalorder %s69, 1
              %s74 = sphi %s0, %s0
              %s75 = sphi [#allocation2], [#allocation2]
            $region38: #{_lambda_.5} parent=27 // loop_header_branch
              %72 = sbr.rel (%p70) target = $region42
            $region39: #{_lambda_.5} parent=27 // loop_body
              %v76 = vld [vmem:[%s74] sm:$0xf]
              %77 = vst [vmem:[%s75] sm:$0xf] %v76
              %v78 = vld [vmem:[%s74 + $0x8] sm:$0xf]
              %79 = vst [vmem:[%s75 + $0x4] sm:$0xf] %v78
              %v80 = vld [vmem:[%s74 + $0x10] sm:$0xf]
              %81 = vst [vmem:[%s75 + $0x8] sm:$0xf] %v80
              %v82 = vld [vmem:[%s74 + $0x18] sm:$0xf]
              %83 = vst [vmem:[%s75 + $0xc] sm:$0xf] %v82
              %v84 = vld [vmem:[%s74 + $0x20] sm:$0xf]
              %85 = vst [vmem:[%s75 + $0x10] sm:$0xf] %v84
              %v86 = vld [vmem:[%s74 + $0x28] sm:$0xf]
              %87 = vst [vmem:[%s75 + $0x14] sm:$0xf] %v86
              %v88 = vld [vmem:[%s74 + $0x30] sm:$0xf]
              %89 = vst [vmem:[%s75 + $0x18] sm:$0xf] %v88
              %v90 = vld [vmem:[%s74 + $0x38] sm:$0xf]
              %91 = vst [vmem:[%s75 + $0x1c] sm:$0xf] %v90
              %v92 = vld [vmem:[%s74 + $0x40] sm:$0xf]
              %93 = vst [vmem:[%s75 + $0x20] sm:$0xf] %v92
              %v94 = vld [vmem:[%s74 + $0x48] sm:$0xf]
              %95 = vst [vmem:[%s75 + $0x24] sm:$0xf] %v94
              %v96 = vld [vmem:[%s74 + $0x50] sm:$0xf]
              %97 = vst [vmem:[%s75 + $0x28] sm:$0xf] %v96
              %v98 = vld [vmem:[%s74 + $0x58] sm:$0xf]
              %99 = vst [vmem:[%s75 + $0x2c] sm:$0xf] %v98
              %v100 = vld [vmem:[%s74 + $0x60] sm:$0xf]
              %101 = vst [vmem:[%s75 + $0x30] sm:$0xf] %v100
              %v102 = vld [vmem:[%s74 + $0x68] sm:$0xf]
              %103 = vst [vmem:[%s75 + $0x34] sm:$0xf] %v102
              %v104 = vld [vmem:[%s74 + $0x70] sm:$0xf]
              %105 = vst [vmem:[%s75 + $0x38] sm:$0xf] %v104
              %v106 = vld [vmem:[%s74 + $0x78] sm:$0xf]
              %107 = vst [vmem:[%s75 + $0x3c] sm:$0xf] %v106
            $region40: #{_lambda_.5} parent=27 // loop_footer
              %s73 = sadd.s32 1, %s69
            $region41: #{_lambda_.5} parent=27 // loop_footer_branch
              %68 = sbr.rel target = $region37
            $region42: #{_lambda_.5} parent=27 // loop_exit
              _
          $region28: #{_lambda_.5} parent=12 // pred_fallthru
            _
        $region13: #{_lambda_.5} parent=8 // pred_fallthru
          _
        // Predicated region
        $region14: #{_lambda_.5} parent=8 // pred_check
          _
        $region15: #{_lambda_.5} parent=8 // pred_check_branch
          %15 = sbr.rel (0) target = $region17
        $region16: #{_lambda_.5} parent=8 // pred_region
          loop: start=0, step=1, limit=1
          $region18: #{_lambda_.5} parent=16 // loop_pre_header
            _
          $region19: #{_lambda_.5} parent=16 // loop_header
            %s18 = sphi 0, %s22
            %p19 = scmp.ge.s32.totalorder %s18, 1
            %s23 = sphi %s0, %s0
            %s24 = sphi [#allocation2], [#allocation2]
          $region20: #{_lambda_.5} parent=16 // loop_header_branch
            %21 = sbr.rel (%p19) target = $region24
          $region21: #{_lambda_.5} parent=16 // loop_body
            %v25 = vld [vmem:[%s23] sm:$0xf]
            %26 = vst [vmem:[%s24] sm:$0xf] %v25
            %v27 = vld [vmem:[%s23 + $0x8] sm:$0xf]
            %28 = vst [vmem:[%s24 + $0x4] sm:$0xf] %v27
            %v29 = vld [vmem:[%s23 + $0x10] sm:$0xf]
            %30 = vst [vmem:[%s24 + $0x8] sm:$0xf] %v29
            %v31 = vld [vmem:[%s23 + $0x18] sm:$0xf]
            %32 = vst [vmem:[%s24 + $0xc] sm:$0xf] %v31
            %v33 = vld [vmem:[%s23 + $0x20] sm:$0xf]
            %34 = vst [vmem:[%s24 + $0x10] sm:$0xf] %v33
            %v35 = vld [vmem:[%s23 + $0x28] sm:$0xf]
            %36 = vst [vmem:[%s24 + $0x14] sm:$0xf] %v35
            %v37 = vld [vmem:[%s23 + $0x30] sm:$0xf]
            %38 = vst [vmem:[%s24 + $0x18] sm:$0xf] %v37
            %v39 = vld [vmem:[%s23 + $0x38] sm:$0xf]
            %40 = vst [vmem:[%s24 + $0x1c] sm:$0xf] %v39
            %v41 = vld [vmem:[%s23 + $0x40] sm:$0xf]
            %42 = vst [vmem:[%s24 + $0x20] sm:$0xf] %v41
            %v43 = vld [vmem:[%s23 + $0x48] sm:$0xf]
            %44 = vst [vmem:[%s24 + $0x24] sm:$0xf] %v43
            %v45 = vld [vmem:[%s23 + $0x50] sm:$0xf]
            %46 = vst [vmem:[%s24 + $0x28] sm:$0xf] %v45
            %v47 = vld [vmem:[%s23 + $0x58] sm:$0xf]
            %48 = vst [vmem:[%s24 + $0x2c] sm:$0xf] %v47
            %v49 = vld [vmem:[%s23 + $0x60] sm:$0xf]
            %50 = vst [vmem:[%s24 + $0x30] sm:$0xf] %v49
            %v51 = vld [vmem:[%s23 + $0x68] sm:$0xf]
            %52 = vst [vmem:[%s24 + $0x34] sm:$0xf] %v51
            %v53 = vld [vmem:[%s23 + $0x70] sm:$0xf]
            %54 = vst [vmem:[%s24 + $0x38] sm:$0xf] %v53
            %v55 = vld [vmem:[%s23 + $0x78] sm:$0xf]
            %56 = vst [vmem:[%s24 + $0x3c] sm:$0xf] %v55
          $region22: #{_lambda_.5} parent=16 // loop_footer
            %s22 = sadd.s32 1, %s18
          $region23: #{_lambda_.5} parent=16 // loop_footer_branch
            %17 = sbr.rel target = $region19
          $region24: #{_lambda_.5} parent=16 // loop_exit
            _
        $region17: #{_lambda_.5} parent=8 // pred_fallthru
          _
      $region9: #{_lambda_.5} parent=4 // pred_fallthru
        _
      %108 = vnop
    $region5: #{_lambda_.5} parent=1 // pred_fallthru
      _
    // Predicated region
    $region43: #{_lambda_.5} parent=1 // pred_check
      _
    $region44: #{_lambda_.5} parent=1 // pred_check_branch
      %110 = sbr.rel (0) target = $region46
    $region45: #{_lambda_.5} parent=1 // pred_region
      _
    $region46: #{_lambda_.5} parent=1 // pred_fallthru
      _
    // Predicated region
    $region47: #{_lambda_.5} parent=1 // pred_check
      _
    $region48: #{_lambda_.5} parent=1 // pred_check_branch
      %112 = sbr.rel (0) target = $region50
    $region49: #{_lambda_.5} parent=1 // pred_region
      _
    $region50: #{_lambda_.5} parent=1 // pred_fallthru
      _
    // Predicated region
    $region51: #{_lambda_.5} parent=1 // pred_check
      _
    $region52: #{_lambda_.5} parent=1 // pred_check_branch
      %114 = sbr.rel (0) target = $region54
    $region53: #{_lambda_.5} parent=1 // pred_region
      _
    $region54: #{_lambda_.5} parent=1 // pred_fallthru
      _
    %v115 = vld [vmem:[#allocation2] sm:$0xf]
    %v116 = vld [vmem:[#allocation2 + $0x4] sm:$0xf]
    %v117 = vld [vmem:[#allocation2 + $0x8] sm:$0xf]
    %v118 = vld [vmem:[#allocation2 + $0xc] sm:$0xf]
    %v119 = vld [vmem:[#allocation2 + $0x10] sm:$0xf]
    %v120 = vld [vmem:[#allocation2 + $0x14] sm:$0xf]
    %v121 = vld [vmem:[#allocation2 + $0x18] sm:$0xf]
    %v122 = vld [vmem:[#allocation2 + $0x1c] sm:$0xf]
    %v123 = vld [vmem:[#allocation2 + $0x20] sm:$0xf]
    %v124 = vld [vmem:[#allocation2 + $0x24] sm:$0xf]
    %v125 = vld [vmem:[#allocation2 + $0x28] sm:$0xf]
    %v126 = vld [vmem:[#allocation2 + $0x2c] sm:$0xf]
    %v127 = vld [vmem:[#allocation2 + $0x30] sm:$0xf]
    %v128 = vld [vmem:[#allocation2 + $0x34] sm:$0xf]
    %v129 = vld [vmem:[#allocation2 + $0x38] sm:$0xf]
    %v130 = vld [vmem:[#allocation2 + $0x3c] sm:$0xf]
    %v131 = vunpack.c.l.bf16 %v115
    %v132 = vunpack.c.l.bf16 %v116
    %v133 = vunpack.c.l.bf16 %v117
    %v134 = vunpack.c.l.bf16 %v118
    %v135 = vunpack.c.l.bf16 %v119
    %v136 = vunpack.c.l.bf16 %v120
    %v137 = vunpack.c.l.bf16 %v121
    %v138 = vunpack.c.l.bf16 %v122
    %v139 = vunpack.c.l.bf16 %v123
    %v140 = vunpack.c.l.bf16 %v124
    %v141 = vunpack.c.l.bf16 %v125
    %v142 = vunpack.c.l.bf16 %v126
    %v143 = vunpack.c.l.bf16 %v127
    %v144 = vunpack.c.l.bf16 %v128
    %v145 = vunpack.c.l.bf16 %v129
    %v146 = vunpack.c.l.bf16 %v130
    %v147 = vld [vmem:[%s1] sm:$0x1]
    %v149 = vlaneseq
    %v150 = vshrl.u32 %v149, 7
    %v151 = vsub.s32 0, %v150
    %v152 = vrot.slane %v147, %v151
    %v154 = vmul.f32 %v131, %v152
    %v155 = vmul.f32 %v132, %v152
    %v156 = vmul.f32 %v133, %v152
    %v157 = vmul.f32 %v134, %v152
    %v158 = vmul.f32 %v135, %v152
    %v159 = vmul.f32 %v136, %v152
    %v160 = vmul.f32 %v137, %v152
    %v161 = vmul.f32 %v138, %v152
    %v162 = vmul.f32 %v139, %v152
    %v163 = vmul.f32 %v140, %v152
    %v164 = vmul.f32 %v141, %v152
    %v165 = vmul.f32 %v142, %v152
    %v166 = vmul.f32 %v143, %v152
    %v167 = vmul.f32 %v144, %v152
    %v168 = vmul.f32 %v145, %v152
    %v169 = vmul.f32 %v146, %v152
    %v170 = vld [vmem:[%s2] sm:$0x1]
    %v172 = vlaneseq
    %v173 = vshrl.u32 %v172, 7
    %v174 = vsub.s32 0, %v173
    %v175 = vrot.slane %v170, %v174
    %v177 = vadd.f32 %v154, %v175
    %v178 = vadd.f32 %v155, %v175
    %v179 = vadd.f32 %v156, %v175
    %v180 = vadd.f32 %v157, %v175
    %v181 = vadd.f32 %v158, %v175
    %v182 = vadd.f32 %v159, %v175
    %v183 = vadd.f32 %v160, %v175
    %v184 = vadd.f32 %v161, %v175
    %v185 = vadd.f32 %v162, %v175
    %v186 = vadd.f32 %v163, %v175
    %v187 = vadd.f32 %v164, %v175
    %v188 = vadd.f32 %v165, %v175
    %v189 = vadd.f32 %v166, %v175
    %v190 = vadd.f32 %v167, %v175
    %v191 = vadd.f32 %v168, %v175
    %v192 = vadd.f32 %v169, %v175
    %v193 = vsub.f32 0.0, %v177
    %v194 = vsub.f32 0.0, %v178
    %v195 = vsub.f32 0.0, %v179
    %v196 = vsub.f32 0.0, %v180
    %v197 = vsub.f32 0.0, %v181
    %v198 = vsub.f32 0.0, %v182
    %v199 = vsub.f32 0.0, %v183
    %v200 = vsub.f32 0.0, %v184
    %v201 = vsub.f32 0.0, %v185
    %v202 = vsub.f32 0.0, %v186
    %v203 = vsub.f32 0.0, %v187
    %v204 = vsub.f32 0.0, %v188
    %v205 = vsub.f32 0.0, %v189
    %v206 = vsub.f32 0.0, %v190
    %v207 = vsub.f32 0.0, %v191
    %v208 = vsub.f32 0.0, %v192
    %v209 = vmul.f32 %v193, 1.442695
    %v210 = vpow.pop %v209
    %v211 = vmul.f32 %v194, 1.442695
    %v212 = vpow.pop %v211
    %v213 = vmul.f32 %v195, 1.442695
    %v214 = vpow.pop %v213
    %v215 = vmul.f32 %v196, 1.442695
    %v216 = vpow.pop %v215
    %v217 = vmul.f32 %v197, 1.442695
    %v218 = vpow.pop %v217
    %v219 = vmul.f32 %v198, 1.442695
    %v220 = vpow.pop %v219
    %v221 = vmul.f32 %v199, 1.442695
    %v222 = vpow.pop %v221
    %v223 = vmul.f32 %v200, 1.442695
    %v224 = vpow.pop %v223
    %v225 = vmul.f32 %v201, 1.442695
    %v226 = vpow.pop %v225
    %v227 = vmul.f32 %v202, 1.442695
    %v228 = vpow.pop %v227
    %v229 = vmul.f32 %v203, 1.442695
    %v230 = vpow.pop %v229
    %v231 = vmul.f32 %v204, 1.442695
    %v232 = vpow.pop %v231
    %v233 = vmul.f32 %v205, 1.442695
    %v234 = vpow.pop %v233
    %v235 = vmul.f32 %v206, 1.442695
    %v236 = vpow.pop %v235
    %v237 = vmul.f32 %v207, 1.442695
    %v238 = vpow.pop %v237
    %v239 = vmul.f32 %v208, 1.442695
    %v240 = vpow.pop %v239
    %v241 = vadd.f32 %v210, 1.0
    %v242 = vadd.f32 %v212, 1.0
    %v243 = vadd.f32 %v214, 1.0
    %v244 = vadd.f32 %v216, 1.0
    %v245 = vadd.f32 %v218, 1.0
    %v246 = vadd.f32 %v220, 1.0
    %v247 = vadd.f32 %v222, 1.0
    %v248 = vadd.f32 %v224, 1.0
    %v249 = vadd.f32 %v226, 1.0
    %v250 = vadd.f32 %v228, 1.0
    %v251 = vadd.f32 %v230, 1.0
    %v252 = vadd.f32 %v232, 1.0
    %v253 = vadd.f32 %v234, 1.0
    %v254 = vadd.f32 %v236, 1.0
    %v255 = vadd.f32 %v238, 1.0
    %v256 = vadd.f32 %v240, 1.0
    %v257 = vrcp.pop %v241
    %v258 = vrcp.pop %v242
    %v259 = vrcp.pop %v243
    %v260 = vrcp.pop %v244
    %v261 = vrcp.pop %v245
    %v262 = vrcp.pop %v246
    %v263 = vrcp.pop %v247
    %v264 = vrcp.pop %v248
    %v265 = vrcp.pop %v249
    %v266 = vrcp.pop %v250
    %v267 = vrcp.pop %v251
    %v268 = vrcp.pop %v252
    %v269 = vrcp.pop %v253
    %v270 = vrcp.pop %v254
    %v271 = vrcp.pop %v255
    %v272 = vrcp.pop %v256
    %v273 = vmul.f32 %v177, %v257
    %v274 = vmul.f32 %v178, %v258
    %v275 = vmul.f32 %v179, %v259
    %v276 = vmul.f32 %v180, %v260
    %v277 = vmul.f32 %v181, %v261
    %v278 = vmul.f32 %v182, %v262
    %v279 = vmul.f32 %v183, %v263
    %v280 = vmul.f32 %v184, %v264
    %v281 = vmul.f32 %v185, %v265
    %v282 = vmul.f32 %v186, %v266
    %v283 = vmul.f32 %v187, %v267
    %v284 = vmul.f32 %v188, %v268
    %v285 = vmul.f32 %v189, %v269
    %v286 = vmul.f32 %v190, %v270
    %v287 = vmul.f32 %v191, %v271
    %v288 = vmul.f32 %v192, %v272
    %v289 = vpack.c.bf16 %v274, %v273
    %v290 = vpack.c.bf16 %v276, %v275
    %v291 = vpack.c.bf16 %v278, %v277
    %v292 = vpack.c.bf16 %v280, %v279
    %v293 = vpack.c.bf16 %v282, %v281
    %v294 = vpack.c.bf16 %v284, %v283
    %v295 = vpack.c.bf16 %v286, %v285
    %v296 = vpack.c.bf16 %v288, %v287
    %v305 = vunpack.c.l.b16 %v289
    %v306 = vunpack.c.h.b16 %v289
    %v307 = vunpack.c.l.b16 %v290
    %v308 = vunpack.c.h.b16 %v290
    %v309 = vunpack.c.l.b16 %v291
    %v310 = vunpack.c.h.b16 %v291
    %v311 = vunpack.c.l.b16 %v292
    %v312 = vunpack.c.h.b16 %v292
    %v313 = vunpack.c.l.b16 %v293
    %v314 = vunpack.c.h.b16 %v293
    %v315 = vunpack.c.l.b16 %v294
    %v316 = vunpack.c.h.b16 %v294
    %v317 = vunpack.c.l.b16 %v295
    %v318 = vunpack.c.h.b16 %v295
    %v319 = vunpack.c.l.b16 %v296
    %v320 = vunpack.c.h.b16 %v296
    %v321 = vpack.c.b16 %v305, %v305
    %v322 = vpack.c.b16 %v306, %v306
    %v323 = vpack.c.b16 %v307, %v307
    %v324 = vpack.c.b16 %v308, %v308
    %v325 = vpack.c.b16 %v309, %v309
    %v326 = vpack.c.b16 %v310, %v310
    %v327 = vpack.c.b16 %v311, %v311
    %v328 = vpack.c.b16 %v312, %v312
    %v329 = vpack.c.b16 %v313, %v313
    %v330 = vpack.c.b16 %v314, %v314
    %v331 = vpack.c.b16 %v315, %v315
    %v332 = vpack.c.b16 %v316, %v316
    %v333 = vpack.c.b16 %v317, %v317
    %v334 = vpack.c.b16 %v318, %v318
    %v335 = vpack.c.b16 %v319, %v319
    %v336 = vpack.c.b16 %v320, %v320
    %353 = vst [vmem:[%s3] sm:$0xf] %v321
    %354 = vst [vmem:[%s3 + $0x4] sm:$0xf] %v322
    %355 = vst [vmem:[%s3 + $0x8] sm:$0xf] %v323
    %356 = vst [vmem:[%s3 + $0xc] sm:$0xf] %v324
    %357 = vst [vmem:[%s3 + $0x10] sm:$0xf] %v325
    %358 = vst [vmem:[%s3 + $0x14] sm:$0xf] %v326
    %359 = vst [vmem:[%s3 + $0x18] sm:$0xf] %v327
    %360 = vst [vmem:[%s3 + $0x1c] sm:$0xf] %v328
    %361 = vst [vmem:[%s3 + $0x20] sm:$0xf] %v329
    %362 = vst [vmem:[%s3 + $0x24] sm:$0xf] %v330
    %363 = vst [vmem:[%s3 + $0x28] sm:$0xf] %v331
    %364 = vst [vmem:[%s3 + $0x2c] sm:$0xf] %v332
    %365 = vst [vmem:[%s3 + $0x30] sm:$0xf] %v333
    %366 = vst [vmem:[%s3 + $0x34] sm:$0xf] %v334
    %367 = vst [vmem:[%s3 + $0x38] sm:$0xf] %v335
    %368 = vst [vmem:[%s3 + $0x3c] sm:$0xf] %v336
    // Predicated region
    $region55: #{_lambda_.5} parent=1 // pred_check
      _
    $region56: #{_lambda_.5} parent=1 // pred_check_branch
      %370 = sbr.rel (0) target = $region58
    $region57: #{_lambda_.5} parent=1 // pred_region
      _
    $region58: #{_lambda_.5} parent=1 // pred_fallthru
      _
    // Predicated region
    $region59: #{_lambda_.5} parent=1 // pred_check
      _
    $region60: #{_lambda_.5} parent=1 // pred_check_branch
      %372 = sbr.rel (0) target = $region62
    $region61: #{_lambda_.5} parent=1 // pred_region
      _
    $region62: #{_lambda_.5} parent=1 // pred_fallthru
      _

// kernel: _lambda_.4
$region0: #{_lambda_.4}
  #allocation0 [shape = 'u32[]', space=smem, size = 0x4, offset = 0x4, fixed_abs, tag = 'smem constant byte address 0x4 - core index']
  #allocation1 [shape = 'u32[144,128]{1,0:T(1,128)}', space=vmem, size = 0x12000, scoped, tag = 'internal scratch']
  %s0 = inlined_call_operand.vmem [shape: bf16[128,128], index: 0, kind: input, shape index: {}]
  %s1 = inlined_call_operand.vmem [shape: bf16[128,256], index: 1, kind: input, shape index: {}]
  %s2 = inlined_call_operand.vmem [shape: bf16[128,256], index: 2, kind: output, shape index: {0}]
  %s3 = inlined_call_operand.vmem [shape: f32[1,1,256], index: 3, kind: output, shape index: {1}]
  %s4 = inlined_call_operand.vmem [shape: f32[1,1,256], index: 4, kind: output, shape index: {2}]
  %5 = xla_tuple %s2, %s3, %s4
  %s6 = sld [smem:[#allocation0]]
  $region34: #{_lambda_.4} parent=0
    _
  %s8 = ssub.s32 1, %s6
  %s9 = scalar_select 0, %s8, %s6
  // Predicated region
  $region2: #{_lambda_.4} parent=0 // pred_check
    _
  $region3: #{_lambda_.4} parent=0 // pred_check_branch
    %11 = sbr.rel (0) target = $region5
  $region4: #{_lambda_.4} parent=0 // pred_region
    _
  $region5: #{_lambda_.4} parent=0 // pred_fallthru
    _
  // Predicated region
  $region6: #{_lambda_.4} parent=0 // pred_check
    _
  $region7: #{_lambda_.4} parent=0 // pred_check_branch
    %13 = sbr.rel (0) target = $region9
  $region8: #{_lambda_.4} parent=0 // pred_region
    _
  $region9: #{_lambda_.4} parent=0 // pred_fallthru
    _
  %v15 = vld [vmem:[%s0] sm:$0xf]
  %v16 = vld [vmem:[%s0 + $0x4] sm:$0xf]
  %v17 = vld [vmem:[%s0 + $0x8] sm:$0xf]
  %v18 = vld [vmem:[%s0 + $0xc] sm:$0xf]
  %v19 = vld [vmem:[%s0 + $0x10] sm:$0xf]
  %v20 = vld [vmem:[%s0 + $0x14] sm:$0xf]
  %v21 = vld [vmem:[%s0 + $0x18] sm:$0xf]
  %v22 = vld [vmem:[%s0 + $0x1c] sm:$0xf]
  %v23 = vld [vmem:[%s0 + $0x20] sm:$0xf]
  %v24 = vld [vmem:[%s0 + $0x24] sm:$0xf]
  %v25 = vld [vmem:[%s0 + $0x28] sm:$0xf]
  %v26 = vld [vmem:[%s0 + $0x2c] sm:$0xf]
  %v27 = vld [vmem:[%s0 + $0x30] sm:$0xf]
  %v28 = vld [vmem:[%s0 + $0x34] sm:$0xf]
  %v29 = vld [vmem:[%s0 + $0x38] sm:$0xf]
  %v30 = vld [vmem:[%s0 + $0x3c] sm:$0xf]
  %v31 = vld [vmem:[%s1] sm:$0xff]
  %v32 = vld [vmem:[%s1 + $0x8] sm:$0xff]
  %v33 = vld [vmem:[%s1 + $0x10] sm:$0xff]
  %v34 = vld [vmem:[%s1 + $0x18] sm:$0xff]
  %v35 = vld [vmem:[%s1 + $0x20] sm:$0xff]
  %v36 = vld [vmem:[%s1 + $0x28] sm:$0xff]
  %v37 = vld [vmem:[%s1 + $0x30] sm:$0xff]
  %v38 = vld [vmem:[%s1 + $0x38] sm:$0xff]
  %v39 = vld [vmem:[%s1 + $0x40] sm:$0xff]
  %v40 = vld [vmem:[%s1 + $0x48] sm:$0xff]
  %v41 = vld [vmem:[%s1 + $0x50] sm:$0xff]
  %v42 = vld [vmem:[%s1 + $0x58] sm:$0xff]
  %v43 = vld [vmem:[%s1 + $0x60] sm:$0xff]
  %v44 = vld [vmem:[%s1 + $0x68] sm:$0xff]
  %v45 = vld [vmem:[%s1 + $0x70] sm:$0xff]
  %v46 = vld [vmem:[%s1 + $0x78] sm:$0xff]
  %v63 = vunpack.c.l.b16 %v15
  %v64 = vunpack.c.l.b16 %v16
  %v65 = vunpack.c.l.b16 %v17
  %v66 = vunpack.c.l.b16 %v18
  %v67 = vunpack.c.l.b16 %v19
  %v68 = vunpack.c.l.b16 %v20
  %v69 = vunpack.c.l.b16 %v21
  %v70 = vunpack.c.l.b16 %v22
  %v71 = vunpack.c.l.b16 %v23
  %v72 = vunpack.c.l.b16 %v24
  %v73 = vunpack.c.l.b16 %v25
  %v74 = vunpack.c.l.b16 %v26
  %v75 = vunpack.c.l.b16 %v27
  %v76 = vunpack.c.l.b16 %v28
  %v77 = vunpack.c.l.b16 %v29
  %v78 = vunpack.c.l.b16 %v30
  %v79 = vpack.c.b16 %v64, %v63
  %v80 = vpack.c.b16 %v66, %v65
  %v81 = vpack.c.b16 %v68, %v67
  %v82 = vpack.c.b16 %v70, %v69
  %v83 = vpack.c.b16 %v72, %v71
  %v84 = vpack.c.b16 %v74, %v73
  %v85 = vpack.c.b16 %v76, %v75
  %v86 = vpack.c.b16 %v78, %v77
  %v111 = vunpack.c.l.b16 %v31
  %v112 = vunpack.c.h.b16 %v31
  %v113 = vunpack.c.l.b16 %v32
  %v114 = vunpack.c.h.b16 %v32
  %v115 = vunpack.c.l.b16 %v33
  %v116 = vunpack.c.h.b16 %v33
  %v117 = vunpack.c.l.b16 %v34
  %v118 = vunpack.c.h.b16 %v34
  %v119 = vunpack.c.l.b16 %v35
  %v120 = vunpack.c.h.b16 %v35
  %v121 = vunpack.c.l.b16 %v36
  %v122 = vunpack.c.h.b16 %v36
  %v123 = vunpack.c.l.b16 %v37
  %v124 = vunpack.c.h.b16 %v37
  %v125 = vunpack.c.l.b16 %v38
  %v126 = vunpack.c.h.b16 %v38
  %v127 = vunpack.c.l.b16 %v39
  %v128 = vunpack.c.h.b16 %v39
  %v129 = vunpack.c.l.b16 %v40
  %v130 = vunpack.c.h.b16 %v40
  %v131 = vunpack.c.l.b16 %v41
  %v132 = vunpack.c.h.b16 %v41
  %v133 = vunpack.c.l.b16 %v42
  %v134 = vunpack.c.h.b16 %v42
  %v135 = vunpack.c.l.b16 %v43
  %v136 = vunpack.c.h.b16 %v43
  %v137 = vunpack.c.l.b16 %v44
  %v138 = vunpack.c.h.b16 %v44
  %v139 = vunpack.c.l.b16 %v45
  %v140 = vunpack.c.h.b16 %v45
  %v141 = vunpack.c.l.b16 %v46
  %v142 = vunpack.c.h.b16 %v46
  %v143 = vpack.c.b16 %v113, %v111
  %v144 = vpack.c.b16 %v114, %v112
  %v145 = vpack.c.b16 %v117, %v115
  %v146 = vpack.c.b16 %v118, %v116
  %v147 = vpack.c.b16 %v121, %v119
  %v148 = vpack.c.b16 %v122, %v120
  %v149 = vpack.c.b16 %v125, %v123
  %v150 = vpack.c.b16 %v126, %v124
  %v151 = vpack.c.b16 %v129, %v127
  %v152 = vpack.c.b16 %v130, %v128
  %v153 = vpack.c.b16 %v133, %v131
  %v154 = vpack.c.b16 %v134, %v132
  %v155 = vpack.c.b16 %v137, %v135
  %v156 = vpack.c.b16 %v138, %v136
  %v157 = vpack.c.b16 %v141, %v139
  %v158 = vpack.c.b16 %v142, %v140
  %175 = vmatprep.subr.bf16.mxu0 %v144
  %176 = vmatpush1.bf16.msra.mxu0 %v143
  %177 = vmatprep.subr.bf16.mxu0 %v146
  %178 = vmatpush1.bf16.msra.mxu0 %v145
  %179 = vmatprep.subr.bf16.mxu0 %v148
  %180 = vmatpush1.bf16.msra.mxu0 %v147
  %181 = vmatprep.subr.bf16.mxu0 %v150
  %182 = vmatpush1.bf16.msra.mxu0 %v149
  %183 = vmatprep.subr.bf16.mxu0 %v152
  %184 = vmatpush1.bf16.msra.mxu0 %v151
  %185 = vmatprep.subr.bf16.mxu0 %v154
  %186 = vmatpush1.bf16.msra.mxu0 %v153
  %187 = vmatprep.subr.bf16.mxu0 %v156
  %188 = vmatpush1.bf16.msra.mxu0 %v155
  %189 = vmatprep.subr.bf16.mxu0 %v158
  %190 = vmatpush1.bf16.msra.mxu0 %v157
  %191 = vmatprep.subr.bf16.mxu0 0
  %192 = vmatpush1.bf16.msra.mxu0 0
  %193 = vmatprep.subr.bf16.mxu0 0
  %194 = vmatpush1.bf16.msra.mxu0 0
  %195 = vmatprep.subr.bf16.mxu0 0
  %196 = vmatpush1.bf16.msra.mxu0 0
  %197 = vmatprep.subr.bf16.mxu0 0
  %198 = vmatpush1.bf16.msra.mxu0 0
  %199 = vmatprep.subr.bf16.mxu0 0
  %200 = vmatpush1.bf16.msra.mxu0 0
  %201 = vmatprep.subr.bf16.mxu0 0
  %202 = vmatpush1.bf16.msra.mxu0 0
  %203 = vmatprep.subr.bf16.mxu0 0
  %204 = vmatpush1.bf16.msra.mxu0 0
  %205 = vmatprep.subr.bf16.mxu0 0
  %206 = vmatpush1.bf16.msra.mxu0 0
  %207 = vmatprep.mubr.bf16.mxu0 0
  %208 = vmatmul.mubr.bf16.gmra.mrb[0].mxu0 %v79
  %v209 = vpop.f32.mrb[0].mxu0
  %v210 = vadd.f32 0.0, %v209
  %v211 = vpop.f32.mrb[0].mxu0
  %v212 = vadd.f32 0.0, %v211
  %v213 = vpop.f32.mrb[0].mxu0
  %v214 = vadd.f32 0.0, %v213
  %v215 = vpop.f32.mrb[0].mxu0
  %v216 = vadd.f32 0.0, %v215
  %217 = vmatprep.mubr.bf16.mxu0 0
  %218 = vmatmul.mubr.bf16.gmra.mrb[0].mxu0 %v80
  %v219 = vpop.f32.mrb[0].mxu0
  %v220 = vadd.f32 0.0, %v219
  %v221 = vpop.f32.mrb[0].mxu0
  %v222 = vadd.f32 0.0, %v221
  %v223 = vpop.f32.mrb[0].mxu0
  %v224 = vadd.f32 0.0, %v223
  %v225 = vpop.f32.mrb[0].mxu0
  %v226 = vadd.f32 0.0, %v225
  %227 = vmatprep.mubr.bf16.mxu0 0
  %228 = vmatmul.mubr.bf16.gmra.mrb[0].mxu0 %v81
  %v229 = vpop.f32.mrb[0].mxu0
  %v230 = vadd.f32 0.0, %v229
  %v231 = vpop.f32.mrb[0].mxu0
  %v232 = vadd.f32 0.0, %v231
  %v233 = vpop.f32.mrb[0].mxu0
  %v234 = vadd.f32 0.0, %v233
  %v235 = vpop.f32.mrb[0].mxu0
  %v236 = vadd.f32 0.0, %v235
  %237 = vmatprep.mubr.bf16.mxu0 0
  %238 = vmatmul.mubr.bf16.gmra.mrb[0].mxu0 %v82
  %v239 = vpop.f32.mrb[0].mxu0
  %v240 = vadd.f32 0.0, %v239
  %v241 = vpop.f32.mrb[0].mxu0
  %v242 = vadd.f32 0.0, %v241
  %v243 = vpop.f32.mrb[0].mxu0
  %v244 = vadd.f32 0.0, %v243
  %v245 = vpop.f32.mrb[0].mxu0
  %v246 = vadd.f32 0.0, %v245
  %247 = vmatprep.mubr.bf16.mxu0 0
  %248 = vmatmul.mubr.bf16.gmra.mrb[0].mxu0 %v83
  %v249 = vpop.f32.mrb[0].mxu0
  %v250 = vadd.f32 0.0, %v249
  %v251 = vpop.f32.mrb[0].mxu0
  %v252 = vadd.f32 0.0, %v251
  %v253 = vpop.f32.mrb[0].mxu0
  %v254 = vadd.f32 0.0, %v253
  %v255 = vpop.f32.mrb[0].mxu0
  %v256 = vadd.f32 0.0, %v255
  %257 = vmatprep.mubr.bf16.mxu0 0
  %258 = vmatmul.mubr.bf16.gmra.mrb[0].mxu0 %v84
  %v259 = vpop.f32.mrb[0].mxu0
  %v260 = vadd.f32 0.0, %v259
  %v261 = vpop.f32.mrb[0].mxu0
  %v262 = vadd.f32 0.0, %v261
  %v263 = vpop.f32.mrb[0].mxu0
  %v264 = vadd.f32 0.0, %v263
  %v265 = vpop.f32.mrb[0].mxu0
  %v266 = vadd.f32 0.0, %v265
  %267 = vmatprep.mubr.bf16.mxu0 0
  %268 = vmatmul.mubr.bf16.gmra.mrb[0].mxu0 %v85
  %v269 = vpop.f32.mrb[0].mxu0
  %v270 = vadd.f32 0.0, %v269
  %v271 = vpop.f32.mrb[0].mxu0
  %v272 = vadd.f32 0.0, %v271
  %v273 = vpop.f32.mrb[0].mxu0
  %v274 = vadd.f32 0.0, %v273
  %v275 = vpop.f32.mrb[0].mxu0
  %v276 = vadd.f32 0.0, %v275
  %277 = vmatprep.mubr.bf16.mxu0 0
  %278 = vmatmul.mubr.bf16.gmra.mrb[0].mxu0 %v86
  %v279 = vpop.f32.mrb[0].mxu0
  %v280 = vadd.f32 0.0, %v279
  %v281 = vpop.f32.mrb[0].mxu0
  %v282 = vadd.f32 0.0, %v281
  %v283 = vpop.f32.mrb[0].mxu0
  %v284 = vadd.f32 0.0, %v283
  %v285 = vpop.f32.mrb[0].mxu0
  %v286 = vadd.f32 0.0, %v285
  %287 = vdwg.mxu0
  %v288 = vpack.c.bf16 %v214, %v210
  %v289 = vpack.c.bf16 %v216, %v212
  %v290 = vpack.c.bf16 %v224, %v220
  %v291 = vpack.c.bf16 %v226, %v222
  %v292 = vpack.c.bf16 %v234, %v230
  %v293 = vpack.c.bf16 %v236, %v232
  %v294 = vpack.c.bf16 %v244, %v240
  %v295 = vpack.c.bf16 %v246, %v242
  %v296 = vpack.c.bf16 %v254, %v250
  %v297 = vpack.c.bf16 %v256, %v252
  %v298 = vpack.c.bf16 %v264, %v260
  %v299 = vpack.c.bf16 %v266, %v262
  %v300 = vpack.c.bf16 %v274, %v270
  %v301 = vpack.c.bf16 %v276, %v272
  %v302 = vpack.c.bf16 %v284, %v280
  %v303 = vpack.c.bf16 %v286, %v282
  %v320 = vunpack.c.l.b16 %v288
  %v321 = vunpack.c.l.b16 %v289
  %v322 = vunpack.c.h.b16 %v288
  %v323 = vunpack.c.h.b16 %v289
  %v324 = vunpack.c.l.b16 %v290
  %v325 = vunpack.c.l.b16 %v291
  %v326 = vunpack.c.h.b16 %v290
  %v327 = vunpack.c.h.b16 %v291
  %v328 = vunpack.c.l.b16 %v292
  %v329 = vunpack.c.l.b16 %v293
  %v330 = vunpack.c.h.b16 %v292
  %v331 = vunpack.c.h.b16 %v293
  %v332 = vunpack.c.l.b16 %v294
  %v333 = vunpack.c.l.b16 %v295
  %v334 = vunpack.c.h.b16 %v294
  %v335 = vunpack.c.h.b16 %v295
  %v336 = vunpack.c.l.b16 %v296
  %v337 = vunpack.c.l.b16 %v297
  %v338 = vunpack.c.h.b16 %v296
  %v339 = vunpack.c.h.b16 %v297
  %v340 = vunpack.c.l.b16 %v298
  %v341 = vunpack.c.l.b16 %v299
  %v342 = vunpack.c.h.b16 %v298
  %v343 = vunpack.c.h.b16 %v299
  %v344 = vunpack.c.l.b16 %v300
  %v345 = vunpack.c.l.b16 %v301
  %v346 = vunpack.c.h.b16 %v300
  %v347 = vunpack.c.h.b16 %v301
  %v348 = vunpack.c.l.b16 %v302
  %v349 = vunpack.c.l.b16 %v303
  %v350 = vunpack.c.h.b16 %v302
  %v351 = vunpack.c.h.b16 %v303
  %v352 = vpack.c.b16 %v321, %v320
  %v353 = vpack.c.b16 %v323, %v322
  %v354 = vpack.c.b16 %v325, %v324
  %v355 = vpack.c.b16 %v327, %v326
  %v356 = vpack.c.b16 %v329, %v328
  %v357 = vpack.c.b16 %v331, %v330
  %v358 = vpack.c.b16 %v333, %v332
  %v359 = vpack.c.b16 %v335, %v334
  %v360 = vpack.c.b16 %v337, %v336
  %v361 = vpack.c.b16 %v339, %v338
  %v362 = vpack.c.b16 %v341, %v340
  %v363 = vpack.c.b16 %v343, %v342
  %v364 = vpack.c.b16 %v345, %v344
  %v365 = vpack.c.b16 %v347, %v346
  %v366 = vpack.c.b16 %v349, %v348
  %v367 = vpack.c.b16 %v351, %v350
  %384 = vst [vmem:[%s2] sm:$0xff] %v352
  %385 = vst [vmem:[%s2 + $0x8] sm:$0xff] %v353
  %386 = vst [vmem:[%s2 + $0x10] sm:$0xff] %v354
  %387 = vst [vmem:[%s2 + $0x18] sm:$0xff] %v355
  %388 = vst [vmem:[%s2 + $0x20] sm:$0xff] %v356
  %389 = vst [vmem:[%s2 + $0x28] sm:$0xff] %v357
  %390 = vst [vmem:[%s2 + $0x30] sm:$0xff] %v358
  %391 = vst [vmem:[%s2 + $0x38] sm:$0xff] %v359
  %392 = vst [vmem:[%s2 + $0x40] sm:$0xff] %v360
  %393 = vst [vmem:[%s2 + $0x48] sm:$0xff] %v361
  %394 = vst [vmem:[%s2 + $0x50] sm:$0xff] %v362
  %395 = vst [vmem:[%s2 + $0x58] sm:$0xff] %v363
  %396 = vst [vmem:[%s2 + $0x60] sm:$0xff] %v364
  %397 = vst [vmem:[%s2 + $0x68] sm:$0xff] %v365
  %398 = vst [vmem:[%s2 + $0x70] sm:$0xff] %v366
  %399 = vst [vmem:[%s2 + $0x78] sm:$0xff] %v367
  %v400 = vadd.f32 %v210, %v214
  %v401 = vadd.f32 %v400, %v220
  %v402 = vadd.f32 %v401, %v224
  %v403 = vadd.f32 %v402, %v230
  %v404 = vadd.f32 %v403, %v234
  %v405 = vadd.f32 %v404, %v240
  %v406 = vadd.f32 %v405, %v244
  %v407 = vadd.f32 %v406, %v250
  %v408 = vadd.f32 %v407, %v254
  %v409 = vadd.f32 %v408, %v260
  %v410 = vadd.f32 %v409, %v264
  %v411 = vadd.f32 %v410, %v270
  %v412 = vadd.f32 %v411, %v274
  %v413 = vadd.f32 %v412, %v280
  %v414 = vadd.f32 %v413, %v284
  %v415 = vrot.slane %v414, 4
  %v416 = vadd.f32 %v414, %v415
  %v417 = vrot.slane %v416, 2
  %v418 = vadd.f32 %v416, %v417
  %v419 = vrot.slane %v418, 1
  %v420 = vadd.f32 %v418, %v419
  %v421 = vadd.f32 %v212, %v216
  %v422 = vadd.f32 %v421, %v222
  %v423 = vadd.f32 %v422, %v226
  %v424 = vadd.f32 %v423, %v232
  %v425 = vadd.f32 %v424, %v236
  %v426 = vadd.f32 %v425, %v242
  %v427 = vadd.f32 %v426, %v246
  %v428 = vadd.f32 %v427, %v252
  %v429 = vadd.f32 %v428, %v256
  %v430 = vadd.f32 %v429, %v262
  %v431 = vadd.f32 %v430, %v266
  %v432 = vadd.f32 %v431, %v272
  %v433 = vadd.f32 %v432, %v276
  %v434 = vadd.f32 %v433, %v282
  %v435 = vadd.f32 %v434, %v286
  %v436 = vrot.slane %v435, 4
  %v437 = vadd.f32 %v435, %v436
  %v438 = vrot.slane %v437, 2
  %v439 = vadd.f32 %v437, %v438
  %v440 = vrot.slane %v439, 1
  %v441 = vadd.f32 %v439, %v440
  %v444 = vcombine.low %v420, %v441
  %v446 = vunpack.c.l.s4 1966171168
  %v447 = vunpack.c.0.s8 %v446
  %v448 = vlaneseq
  %v449 = vshrl.u32 %v448, 7
  %v450 = vsub.s32 %v447, %v449
  %v451 = vrot.slane %v444, %v450
  %v453 = vunpack.c.l.s4 1966171168
  %v454 = vunpack.c.0.s8 %v453
  %v455 = vlaneseq
  %v456 = vshrl.u32 %v455, 7
  %v457 = vsub.s32 %v454, %v456
  %v458 = vrot.slane %v451, %v457
  %v460 = vlaneseq
  %vm461 = vcmp.ge.s32.totalorder %v460, 0
  %vm462 = vcmp.lt.s32.totalorder %v460, 256
  %vm463 = vmand %vm461, %vm462
  %464 = vst.msk [vmem:[%s3] sm:$0x3] %vm463, %v458
  %v465 = vmul.f32 %v210, %v210
  %v466 = vmul.f32 %v212, %v212
  %v467 = vmul.f32 %v214, %v214
  %v468 = vmul.f32 %v216, %v216
  %v469 = vmul.f32 %v220, %v220
  %v470 = vmul.f32 %v222, %v222
  %v471 = vmul.f32 %v224, %v224
  %v472 = vmul.f32 %v226, %v226
  %v473 = vmul.f32 %v230, %v230
  %v474 = vmul.f32 %v232, %v232
  %v475 = vmul.f32 %v234, %v234
  %v476 = vmul.f32 %v236, %v236
  %v477 = vmul.f32 %v240, %v240
  %v478 = vmul.f32 %v242, %v242
  %v479 = vmul.f32 %v244, %v244
  %v480 = vmul.f32 %v246, %v246
  %v481 = vmul.f32 %v250, %v250
  %v482 = vmul.f32 %v252, %v252
  %v483 = vmul.f32 %v254, %v254
  %v484 = vmul.f32 %v256, %v256
  %v485 = vmul.f32 %v260, %v260
  %v486 = vmul.f32 %v262, %v262
  %v487 = vmul.f32 %v264, %v264
  %v488 = vmul.f32 %v266, %v266
  %v489 = vmul.f32 %v270, %v270
  %v490 = vmul.f32 %v272, %v272
  %v491 = vmul.f32 %v274, %v274
  %v492 = vmul.f32 %v276, %v276
  %v493 = vmul.f32 %v280, %v280
  %v494 = vmul.f32 %v282, %v282
  %v495 = vmul.f32 %v284, %v284
  %v496 = vmul.f32 %v286, %v286
  %v497 = vadd.f32 %v465, %v467
  %v498 = vadd.f32 %v497, %v469
  %v499 = vadd.f32 %v498, %v471
  %v500 = vadd.f32 %v499, %v473
  %v501 = vadd.f32 %v500, %v475
  %v502 = vadd.f32 %v501, %v477
  %v503 = vadd.f32 %v502, %v479
  %v504 = vadd.f32 %v503, %v481
  %v505 = vadd.f32 %v504, %v483
  %v506 = vadd.f32 %v505, %v485
  %v507 = vadd.f32 %v506, %v487
  %v508 = vadd.f32 %v507, %v489
  %v509 = vadd.f32 %v508, %v491
  %v510 = vadd.f32 %v509, %v493
  %v511 = vadd.f32 %v510, %v495
  %v512 = vrot.slane %v511, 4
  %v513 = vadd.f32 %v511, %v512
  %v514 = vrot.slane %v513, 2
  %v515 = vadd.f32 %v513, %v514
  %v516 = vrot.slane %v515, 1
  %v517 = vadd.f32 %v515, %v516
  %v518 = vadd.f32 %v466, %v468
  %v519 = vadd.f32 %v518, %v470
  %v520 = vadd.f32 %v519, %v472
  %v521 = vadd.f32 %v520, %v474
  %v522 = vadd.f32 %v521, %v476
  %v523 = vadd.f32 %v522, %v478
  %v524 = vadd.f32 %v523, %v480
  %v525 = vadd.f32 %v524, %v482
  %v526 = vadd.f32 %v525, %v484
  %v527 = vadd.f32 %v526, %v486
  %v528 = vadd.f32 %v527, %v488
  %v529 = vadd.f32 %v528, %v490
  %v530 = vadd.f32 %v529, %v492
  %v531 = vadd.f32 %v530, %v494
  %v532 = vadd.f32 %v531, %v496
  %v533 = vrot.slane %v532, 4
  %v534 = vadd.f32 %v532, %v533
  %v535 = vrot.slane %v534, 2
  %v536 = vadd.f32 %v534, %v535
  %v537 = vrot.slane %v536, 1
  %v538 = vadd.f32 %v536, %v537
  %v541 = vcombine.low %v517, %v538
  %v543 = vunpack.c.l.s4 1966171168
  %v544 = vunpack.c.0.s8 %v543
  %v545 = vlaneseq
  %v546 = vshrl.u32 %v545, 7
  %v547 = vsub.s32 %v544, %v546
  %v548 = vrot.slane %v541, %v547
  %v550 = vunpack.c.l.s4 1966171168
  %v551 = vunpack.c.0.s8 %v550
  %v552 = vlaneseq
  %v553 = vshrl.u32 %v552, 7
  %v554 = vsub.s32 %v551, %v553
  %v555 = vrot.slane %v548, %v554
  %557 = vst.msk [vmem:[%s4] sm:$0x3] %vm463, %v555
  // Predicated region
  $region10: #{_lambda_.4} parent=0 // pred_check
    _
  $region11: #{_lambda_.4} parent=0 // pred_check_branch
    %559 = sbr.rel (0) target = $region13
  $region12: #{_lambda_.4} parent=0 // pred_region
    _
  $region13: #{_lambda_.4} parent=0 // pred_fallthru
    _
  // Predicated region
  $region14: #{_lambda_.4} parent=0 // pred_check
    _
  $region15: #{_lambda_.4} parent=0 // pred_check_branch
    %561 = sbr.rel (0) target = $region17
  $region16: #{_lambda_.4} parent=0 // pred_region
    _
  $region17: #{_lambda_.4} parent=0 // pred_fallthru
    _
  // Predicated region
  $region18: #{_lambda_.4} parent=0 // pred_check
    _
  $region19: #{_lambda_.4} parent=0 // pred_check_branch
    %563 = sbr.rel (0) target = $region21
  $region20: #{_lambda_.4} parent=0 // pred_region
    _
  $region21: #{_lambda_.4} parent=0 // pred_fallthru
    _
  // Predicated region
  $region22: #{_lambda_.4} parent=0 // pred_check
    _
  $region23: #{_lambda_.4} parent=0 // pred_check_branch
    %565 = sbr.rel (0) target = $region25
  $region24: #{_lambda_.4} parent=0 // pred_region
    _
  $region25: #{_lambda_.4} parent=0 // pred_fallthru
    _
  // Predicated region
  $region26: #{_lambda_.4} parent=0 // pred_check
    _
  $region27: #{_lambda_.4} parent=0 // pred_check_branch
    %567 = sbr.rel (0) target = $region29
  $region28: #{_lambda_.4} parent=0 // pred_region
    _
  $region29: #{_lambda_.4} parent=0 // pred_fallthru
    _
  // Predicated region
  $region30: #{_lambda_.4} parent=0 // pred_check
    _
  $region31: #{_lambda_.4} parent=0 // pred_check_branch
    %569 = sbr.rel (0) target = $region33
  $region32: #{_lambda_.4} parent=0 // pred_region
    _
  $region33: #{_lambda_.4} parent=0 // pred_fallthru
    _

// kernel: _lambda_.6
$region0: #{_lambda_.6}
  #allocation0 [shape = 'u32[]', space=smem, size = 0x4, offset = 0x4, fixed_abs, tag = 'smem constant byte address 0x4 - core index']
  #allocation1 [shape = 'u32[144,128]{1,0:T(1,128)}', space=vmem, size = 0x12000, scoped, tag = 'internal scratch']
  %s0 = inlined_call_operand.vmem [shape: bf16[128,128], index: 0, kind: input, shape index: {}]
  %s1 = inlined_call_operand.vmem [shape: bf16[128,128], index: 1, kind: input, shape index: {}]
  %s2 = inlined_call_operand.vmem [shape: bf16[128,128], index: 2, kind: output, shape index: {0}]
  %s3 = inlined_call_operand.vmem [shape: f32[1,1,128], index: 3, kind: output, shape index: {1}]
  %s4 = inlined_call_operand.vmem [shape: f32[1,1,128], index: 4, kind: output, shape index: {2}]
  %5 = xla_tuple %s2, %s3, %s4
  %s6 = sld [smem:[#allocation0]]
  $region34: #{_lambda_.6} parent=0
    _
  %s8 = ssub.s32 1, %s6
  %s9 = scalar_select 0, %s8, %s6
  // Predicated region
  $region2: #{_lambda_.6} parent=0 // pred_check
    _
  $region3: #{_lambda_.6} parent=0 // pred_check_branch
    %11 = sbr.rel (0) target = $region5
  $region4: #{_lambda_.6} parent=0 // pred_region
    _
  $region5: #{_lambda_.6} parent=0 // pred_fallthru
    _
  // Predicated region
  $region6: #{_lambda_.6} parent=0 // pred_check
    _
  $region7: #{_lambda_.6} parent=0 // pred_check_branch
    %13 = sbr.rel (0) target = $region9
  $region8: #{_lambda_.6} parent=0 // pred_region
    _
  $region9: #{_lambda_.6} parent=0 // pred_fallthru
    _
  %v15 = vld [vmem:[%s0] sm:$0xf]
  %v16 = vld [vmem:[%s0 + $0x4] sm:$0xf]
  %v17 = vld [vmem:[%s0 + $0x8] sm:$0xf]
  %v18 = vld [vmem:[%s0 + $0xc] sm:$0xf]
  %v19 = vld [vmem:[%s0 + $0x10] sm:$0xf]
  %v20 = vld [vmem:[%s0 + $0x14] sm:$0xf]
  %v21 = vld [vmem:[%s0 + $0x18] sm:$0xf]
  %v22 = vld [vmem:[%s0 + $0x1c] sm:$0xf]
  %v23 = vld [vmem:[%s0 + $0x20] sm:$0xf]
  %v24 = vld [vmem:[%s0 + $0x24] sm:$0xf]
  %v25 = vld [vmem:[%s0 + $0x28] sm:$0xf]
  %v26 = vld [vmem:[%s0 + $0x2c] sm:$0xf]
  %v27 = vld [vmem:[%s0 + $0x30] sm:$0xf]
  %v28 = vld [vmem:[%s0 + $0x34] sm:$0xf]
  %v29 = vld [vmem:[%s0 + $0x38] sm:$0xf]
  %v30 = vld [vmem:[%s0 + $0x3c] sm:$0xf]
  %v31 = vld [vmem:[%s1] sm:$0xf]
  %v32 = vld [vmem:[%s1 + $0x4] sm:$0xf]
  %v33 = vld [vmem:[%s1 + $0x8] sm:$0xf]
  %v34 = vld [vmem:[%s1 + $0xc] sm:$0xf]
  %v35 = vld [vmem:[%s1 + $0x10] sm:$0xf]
  %v36 = vld [vmem:[%s1 + $0x14] sm:$0xf]
  %v37 = vld [vmem:[%s1 + $0x18] sm:$0xf]
  %v38 = vld [vmem:[%s1 + $0x1c] sm:$0xf]
  %v39 = vld [vmem:[%s1 + $0x20] sm:$0xf]
  %v40 = vld [vmem:[%s1 + $0x24] sm:$0xf]
  %v41 = vld [vmem:[%s1 + $0x28] sm:$0xf]
  %v42 = vld [vmem:[%s1 + $0x2c] sm:$0xf]
  %v43 = vld [vmem:[%s1 + $0x30] sm:$0xf]
  %v44 = vld [vmem:[%s1 + $0x34] sm:$0xf]
  %v45 = vld [vmem:[%s1 + $0x38] sm:$0xf]
  %v46 = vld [vmem:[%s1 + $0x3c] sm:$0xf]
  %v63 = vunpack.c.l.b16 %v15
  %v64 = vunpack.c.l.b16 %v16
  %v65 = vunpack.c.l.b16 %v17
  %v66 = vunpack.c.l.b16 %v18
  %v67 = vunpack.c.l.b16 %v19
  %v68 = vunpack.c.l.b16 %v20
  %v69 = vunpack.c.l.b16 %v21
  %v70 = vunpack.c.l.b16 %v22
  %v71 = vunpack.c.l.b16 %v23
  %v72 = vunpack.c.l.b16 %v24
  %v73 = vunpack.c.l.b16 %v25
  %v74 = vunpack.c.l.b16 %v26
  %v75 = vunpack.c.l.b16 %v27
  %v76 = vunpack.c.l.b16 %v28
  %v77 = vunpack.c.l.b16 %v29
  %v78 = vunpack.c.l.b16 %v30
  %v79 = vpack.c.b16 %v64, %v63
  %v80 = vpack.c.b16 %v66, %v65
  %v81 = vpack.c.b16 %v68, %v67
  %v82 = vpack.c.b16 %v70, %v69
  %v83 = vpack.c.b16 %v72, %v71
  %v84 = vpack.c.b16 %v74, %v73
  %v85 = vpack.c.b16 %v76, %v75
  %v86 = vpack.c.b16 %v78, %v77
  %v111 = vunpack.c.l.b16 %v31
  %v112 = vunpack.c.l.b16 %v32
  %v113 = vunpack.c.l.b16 %v33
  %v114 = vunpack.c.l.b16 %v34
  %v115 = vunpack.c.l.b16 %v35
  %v116 = vunpack.c.l.b16 %v36
  %v117 = vunpack.c.l.b16 %v37
  %v118 = vunpack.c.l.b16 %v38
  %v119 = vunpack.c.l.b16 %v39
  %v120 = vunpack.c.l.b16 %v40
  %v121 = vunpack.c.l.b16 %v41
  %v122 = vunpack.c.l.b16 %v42
  %v123 = vunpack.c.l.b16 %v43
  %v124 = vunpack.c.l.b16 %v44
  %v125 = vunpack.c.l.b16 %v45
  %v126 = vunpack.c.l.b16 %v46
  %v127 = vpack.c.b16 %v112, %v111
  %v128 = vpack.c.b16 %v114, %v113
  %v129 = vpack.c.b16 %v116, %v115
  %v130 = vpack.c.b16 %v118, %v117
  %v131 = vpack.c.b16 %v120, %v119
  %v132 = vpack.c.b16 %v122, %v121
  %v133 = vpack.c.b16 %v124, %v123
  %v134 = vpack.c.b16 %v126, %v125
  %143 = vmatprep.subr.bf16.mxu0 0
  %144 = vmatpush1.bf16.msra.mxu0 %v127
  %145 = vmatprep.subr.bf16.mxu0 0
  %146 = vmatpush1.bf16.msra.mxu0 %v128
  %147 = vmatprep.subr.bf16.mxu0 0
  %148 = vmatpush1.bf16.msra.mxu0 %v129
  %149 = vmatprep.subr.bf16.mxu0 0
  %150 = vmatpush1.bf16.msra.mxu0 %v130
  %151 = vmatprep.subr.bf16.mxu0 0
  %152 = vmatpush1.bf16.msra.mxu0 %v131
  %153 = vmatprep.subr.bf16.mxu0 0
  %154 = vmatpush1.bf16.msra.mxu0 %v132
  %155 = vmatprep.subr.bf16.mxu0 0
  %156 = vmatpush1.bf16.msra.mxu0 %v133
  %157 = vmatprep.subr.bf16.mxu0 0
  %158 = vmatpush1.bf16.msra.mxu0 %v134
  %159 = vmatprep.subr.bf16.mxu0 0
  %160 = vmatpush1.bf16.msra.mxu0 0
  %161 = vmatprep.subr.bf16.mxu0 0
  %162 = vmatpush1.bf16.msra.mxu0 0
  %163 = vmatprep.subr.bf16.mxu0 0
  %164 = vmatpush1.bf16.msra.mxu0 0
  %165 = vmatprep.subr.bf16.mxu0 0
  %166 = vmatpush1.bf16.msra.mxu0 0
  %167 = vmatprep.subr.bf16.mxu0 0
  %168 = vmatpush1.bf16.msra.mxu0 0
  %169 = vmatprep.subr.bf16.mxu0 0
  %170 = vmatpush1.bf16.msra.mxu0 0
  %171 = vmatprep.subr.bf16.mxu0 0
  %172 = vmatpush1.bf16.msra.mxu0 0
  %173 = vmatprep.subr.bf16.mxu0 0
  %174 = vmatpush1.bf16.msra.mxu0 0
  %175 = vmatprep.mubr.bf16.mxu0 0
  %176 = vmatmul.mubr.bf16.gmra.mrb[0].mxu0 %v79
  %v177 = vpop.f32.mrb[0].mxu0
  %v178 = vadd.f32 0.0, %v177
  %v179 = vpop.f32.mrb[0].mxu0
  %v180 = vpop.f32.mrb[0].mxu0
  %v181 = vadd.f32 0.0, %v180
  %v182 = vpop.f32.mrb[0].mxu0
  %183 = vmatprep.mubr.bf16.mxu0 0
  %184 = vmatmul.mubr.bf16.gmra.mrb[0].mxu0 %v80
  %v185 = vpop.f32.mrb[0].mxu0
  %v186 = vadd.f32 0.0, %v185
  %v187 = vpop.f32.mrb[0].mxu0
  %v188 = vpop.f32.mrb[0].mxu0
  %v189 = vadd.f32 0.0, %v188
  %v190 = vpop.f32.mrb[0].mxu0
  %191 = vmatprep.mubr.bf16.mxu0 0
  %192 = vmatmul.mubr.bf16.gmra.mrb[0].mxu0 %v81
  %v193 = vpop.f32.mrb[0].mxu0
  %v194 = vadd.f32 0.0, %v193
  %v195 = vpop.f32.mrb[0].mxu0
  %v196 = vpop.f32.mrb[0].mxu0
  %v197 = vadd.f32 0.0, %v196
  %v198 = vpop.f32.mrb[0].mxu0
  %199 = vmatprep.mubr.bf16.mxu0 0
  %200 = vmatmul.mubr.bf16.gmra.mrb[0].mxu0 %v82
  %v201 = vpop.f32.mrb[0].mxu0
  %v202 = vadd.f32 0.0, %v201
  %v203 = vpop.f32.mrb[0].mxu0
  %v204 = vpop.f32.mrb[0].mxu0
  %v205 = vadd.f32 0.0, %v204
  %v206 = vpop.f32.mrb[0].mxu0
  %207 = vmatprep.mubr.bf16.mxu0 0
  %208 = vmatmul.mubr.bf16.gmra.mrb[0].mxu0 %v83
  %v209 = vpop.f32.mrb[0].mxu0
  %v210 = vadd.f32 0.0, %v209
  %v211 = vpop.f32.mrb[0].mxu0
  %v212 = vpop.f32.mrb[0].mxu0
  %v213 = vadd.f32 0.0, %v212
  %v214 = vpop.f32.mrb[0].mxu0
  %215 = vmatprep.mubr.bf16.mxu0 0
  %216 = vmatmul.mubr.bf16.gmra.mrb[0].mxu0 %v84
  %v217 = vpop.f32.mrb[0].mxu0
  %v218 = vadd.f32 0.0, %v217
  %v219 = vpop.f32.mrb[0].mxu0
  %v220 = vpop.f32.mrb[0].mxu0
  %v221 = vadd.f32 0.0, %v220
  %v222 = vpop.f32.mrb[0].mxu0
  %223 = vmatprep.mubr.bf16.mxu0 0
  %224 = vmatmul.mubr.bf16.gmra.mrb[0].mxu0 %v85
  %v225 = vpop.f32.mrb[0].mxu0
  %v226 = vadd.f32 0.0, %v225
  %v227 = vpop.f32.mrb[0].mxu0
  %v228 = vpop.f32.mrb[0].mxu0
  %v229 = vadd.f32 0.0, %v228
  %v230 = vpop.f32.mrb[0].mxu0
  %231 = vmatprep.mubr.bf16.mxu0 0
  %232 = vmatmul.mubr.bf16.gmra.mrb[0].mxu0 %v86
  %v233 = vpop.f32.mrb[0].mxu0
  %v234 = vadd.f32 0.0, %v233
  %v235 = vpop.f32.mrb[0].mxu0
  %v236 = vpop.f32.mrb[0].mxu0
  %v237 = vadd.f32 0.0, %v236
  %v238 = vpop.f32.mrb[0].mxu0
  %239 = vdwg.mxu0
  %v240 = vpack.c.bf16 %v181, %v178
  %v241 = vpack.c.bf16 %v189, %v186
  %v242 = vpack.c.bf16 %v197, %v194
  %v243 = vpack.c.bf16 %v205, %v202
  %v244 = vpack.c.bf16 %v213, %v210
  %v245 = vpack.c.bf16 %v221, %v218
  %v246 = vpack.c.bf16 %v229, %v226
  %v247 = vpack.c.bf16 %v237, %v234
  %v256 = vunpack.c.l.b16 %v240
  %v257 = vunpack.c.h.b16 %v240
  %v258 = vunpack.c.l.b16 %v241
  %v259 = vunpack.c.h.b16 %v241
  %v260 = vunpack.c.l.b16 %v242
  %v261 = vunpack.c.h.b16 %v242
  %v262 = vunpack.c.l.b16 %v243
  %v263 = vunpack.c.h.b16 %v243
  %v264 = vunpack.c.l.b16 %v244
  %v265 = vunpack.c.h.b16 %v244
  %v266 = vunpack.c.l.b16 %v245
  %v267 = vunpack.c.h.b16 %v245
  %v268 = vunpack.c.l.b16 %v246
  %v269 = vunpack.c.h.b16 %v246
  %v270 = vunpack.c.l.b16 %v247
  %v271 = vunpack.c.h.b16 %v247
  %v272 = vpack.c.b16 %v256, %v256
  %v273 = vpack.c.b16 %v257, %v257
  %v274 = vpack.c.b16 %v258, %v258
  %v275 = vpack.c.b16 %v259, %v259
  %v276 = vpack.c.b16 %v260, %v260
  %v277 = vpack.c.b16 %v261, %v261
  %v278 = vpack.c.b16 %v262, %v262
  %v279 = vpack.c.b16 %v263, %v263
  %v280 = vpack.c.b16 %v264, %v264
  %v281 = vpack.c.b16 %v265, %v265
  %v282 = vpack.c.b16 %v266, %v266
  %v283 = vpack.c.b16 %v267, %v267
  %v284 = vpack.c.b16 %v268, %v268
  %v285 = vpack.c.b16 %v269, %v269
  %v286 = vpack.c.b16 %v270, %v270
  %v287 = vpack.c.b16 %v271, %v271
  %304 = vst [vmem:[%s2] sm:$0xf] %v272
  %305 = vst [vmem:[%s2 + $0x4] sm:$0xf] %v273
  %306 = vst [vmem:[%s2 + $0x8] sm:$0xf] %v274
  %307 = vst [vmem:[%s2 + $0xc] sm:$0xf] %v275
  %308 = vst [vmem:[%s2 + $0x10] sm:$0xf] %v276
  %309 = vst [vmem:[%s2 + $0x14] sm:$0xf] %v277
  %310 = vst [vmem:[%s2 + $0x18] sm:$0xf] %v278
  %311 = vst [vmem:[%s2 + $0x1c] sm:$0xf] %v279
  %312 = vst [vmem:[%s2 + $0x20] sm:$0xf] %v280
  %313 = vst [vmem:[%s2 + $0x24] sm:$0xf] %v281
  %314 = vst [vmem:[%s2 + $0x28] sm:$0xf] %v282
  %315 = vst [vmem:[%s2 + $0x2c] sm:$0xf] %v283
  %316 = vst [vmem:[%s2 + $0x30] sm:$0xf] %v284
  %317 = vst [vmem:[%s2 + $0x34] sm:$0xf] %v285
  %318 = vst [vmem:[%s2 + $0x38] sm:$0xf] %v286
  %319 = vst [vmem:[%s2 + $0x3c] sm:$0xf] %v287
  %v320 = vadd.f32 %v178, %v181
  %v321 = vadd.f32 %v320, %v186
  %v322 = vadd.f32 %v321, %v189
  %v323 = vadd.f32 %v322, %v194
  %v324 = vadd.f32 %v323, %v197
  %v325 = vadd.f32 %v324, %v202
  %v326 = vadd.f32 %v325, %v205
  %v327 = vadd.f32 %v326, %v210
  %v328 = vadd.f32 %v327, %v213
  %v329 = vadd.f32 %v328, %v218
  %v330 = vadd.f32 %v329, %v221
  %v331 = vadd.f32 %v330, %v226
  %v332 = vadd.f32 %v331, %v229
  %v333 = vadd.f32 %v332, %v234
  %v334 = vadd.f32 %v333, %v237
  %v335 = vrot.slane %v334, 4
  %v336 = vadd.f32 %v334, %v335
  %v337 = vrot.slane %v336, 2
  %v338 = vadd.f32 %v336, %v337
  %v339 = vrot.slane %v338, 1
  %v340 = vadd.f32 %v338, %v339
  %341 = vst [vmem:[%s3] sm:$0x1] %v340
  %v342 = vmul.f32 %v178, %v178
  %v343 = vmul.f32 %v181, %v181
  %v344 = vmul.f32 %v186, %v186
  %v345 = vmul.f32 %v189, %v189
  %v346 = vmul.f32 %v194, %v194
  %v347 = vmul.f32 %v197, %v197
  %v348 = vmul.f32 %v202, %v202
  %v349 = vmul.f32 %v205, %v205
  %v350 = vmul.f32 %v210, %v210
  %v351 = vmul.f32 %v213, %v213
  %v352 = vmul.f32 %v218, %v218
  %v353 = vmul.f32 %v221, %v221
  %v354 = vmul.f32 %v226, %v226
  %v355 = vmul.f32 %v229, %v229
  %v356 = vmul.f32 %v234, %v234
  %v357 = vmul.f32 %v237, %v237
  %v358 = vadd.f32 %v342, %v343
  %v359 = vadd.f32 %v358, %v344
  %v360 = vadd.f32 %v359, %v345
  %v361 = vadd.f32 %v360, %v346
  %v362 = vadd.f32 %v361, %v347
  %v363 = vadd.f32 %v362, %v348
  %v364 = vadd.f32 %v363, %v349
  %v365 = vadd.f32 %v364, %v350
  %v366 = vadd.f32 %v365, %v351
  %v367 = vadd.f32 %v366, %v352
  %v368 = vadd.f32 %v367, %v353
  %v369 = vadd.f32 %v368, %v354
  %v370 = vadd.f32 %v369, %v355
  %v371 = vadd.f32 %v370, %v356
  %v372 = vadd.f32 %v371, %v357
  %v373 = vrot.slane %v372, 4
  %v374 = vadd.f32 %v372, %v373
  %v375 = vrot.slane %v374, 2
  %v376 = vadd.f32 %v374, %v375
  %v377 = vrot.slane %v376, 1
  %v378 = vadd.f32 %v376, %v377
  %379 = vst [vmem:[%s4] sm:$0x1] %v378
  // Predicated region
  $region10: #{_lambda_.6} parent=0 // pred_check
    _
  $region11: #{_lambda_.6} parent=0 // pred_check_branch
    %381 = sbr.rel (0) target = $region13
  $region12: #{_lambda_.6} parent=0 // pred_region
    _
  $region13: #{_lambda_.6} parent=0 // pred_fallthru
    _
  // Predicated region
  $region14: #{_lambda_.6} parent=0 // pred_check
    _
  $region15: #{_lambda_.6} parent=0 // pred_check_branch
    %383 = sbr.rel (0) target = $region17
  $region16: #{_lambda_.6} parent=0 // pred_region
    _
  $region17: #{_lambda_.6} parent=0 // pred_fallthru
    _
  // Predicated region
  $region18: #{_lambda_.6} parent=0 // pred_check
    _
  $region19: #{_lambda_.6} parent=0 // pred_check_branch
    %385 = sbr.rel (0) target = $region21
  $region20: #{_lambda_.6} parent=0 // pred_region
    _
  $region21: #{_lambda_.6} parent=0 // pred_fallthru
    _
  // Predicated region
  $region22: #{_lambda_.6} parent=0 // pred_check
    _
  $region23: #{_lambda_.6} parent=0 // pred_check_branch
    %387 = sbr.rel (0) target = $region25
  $region24: #{_lambda_.6} parent=0 // pred_region
    _
  $region25: #{_lambda_.6} parent=0 // pred_fallthru
    _
  // Predicated region
  $region26: #{_lambda_.6} parent=0 // pred_check
    _
  $region27: #{_lambda_.6} parent=0 // pred_check_branch
    %389 = sbr.rel (0) target = $region29
  $region28: #{_lambda_.6} parent=0 // pred_region
    _
  $region29: #{_lambda_.6} parent=0 // pred_fallthru
    _
  // Predicated region
  $region30: #{_lambda_.6} parent=0 // pred_check
    _
  $region31: #{_lambda_.6} parent=0 // pred_check_branch
    %391 = sbr.rel (0) target = $region33
  $region32: #{_lambda_.6} parent=0 // pred_region
    _
  $region33: #{_lambda_.6} parent=0 // pred_fallthru
    _

// kernel: _lambda_.7
$region0: #{_lambda_.7}
  #allocation0 [shape = 'u32[]', space=smem, size = 0x4, offset = 0x4, fixed_abs, tag = 'smem constant byte address 0x4 - core index']
  #allocation1 [shape = 'u32[144,128]{1,0:T(1,128)}', space=vmem, size = 0x12000, scoped, tag = 'internal scratch']
  %s0 = inlined_call_operand.vmem [shape: bf16[128,256], index: 0, kind: input, shape index: {}]
  %s1 = inlined_call_operand.vmem [shape: f32[1,128], index: 1, kind: input, shape index: {}]
  %s2 = inlined_call_operand.vmem [shape: f32[1,128], index: 2, kind: input, shape index: {}]
  %s3 = inlined_call_operand.vmem [shape: bf16[128,128], index: 3, kind: input, shape index: {}]
  %s4 = inlined_call_operand.vmem [shape: f32[1,128], index: 4, kind: input, shape index: {}]
  %s5 = inlined_call_operand.vmem [shape: f32[1,128], index: 5, kind: input, shape index: {}]
  %s6 = inlined_call_operand.vmem [shape: f32[128,128], index: 6, kind: output, shape index: {}]
  %s7 = sld [smem:[#allocation0]]
  $region75: #{_lambda_.7} parent=0
    _
  %s9 = ssub.s32 1, %s7
  %s10 = scalar_select 0, %s9, %s7
  $region1: #{_lambda_.7} parent=0
    #allocation2 [shape = 'u8[32768]{0}', space=vmem, size = 0x8000, scoped, tag = 'input window, operand 0, single buffered']
    // Predicated region
    $region2: #{_lambda_.7} parent=1 // pred_check
      _
    $region3: #{_lambda_.7} parent=1 // pred_check_branch
      %12 = sbr.rel (0) target = $region5
    $region4: #{_lambda_.7} parent=1 // pred_region
      %s13 = scalar_lea.vmem %s0, 4
      // Predicated region
      $region6: #{_lambda_.7} parent=4 // pred_check
        _
      $region7: #{_lambda_.7} parent=4 // pred_check_branch
        %15 = sbr.rel (0) target = $region9
      $region8: #{_lambda_.7} parent=4 // pred_region
        // Predicated region
        $region10: #{_lambda_.7} parent=8 // pred_check
          _
        $region11: #{_lambda_.7} parent=8 // pred_check_branch
          %17 = sbr.rel target = $region13
        $region12: #{_lambda_.7} parent=8 // pred_region
          // Predicated region
          $region25: #{_lambda_.7} parent=12 // pred_check
            _
          $region26: #{_lambda_.7} parent=12 // pred_check_branch
            %62 = sbr.rel (0) target = $region28
          $region27: #{_lambda_.7} parent=12 // pred_region
            loop: start=0, step=1, limit=1
            $region29: #{_lambda_.7} parent=27 // loop_pre_header
              _
            $region30: #{_lambda_.7} parent=27 // loop_header
              %s64 = sphi 0, %s68
              %p65 = scmp.ge.s32.totalorder %s64, 1
              %s69 = sphi %s13, %s13
              %s70 = sphi [#allocation2], [#allocation2]
            $region31: #{_lambda_.7} parent=27 // loop_header_branch
              %67 = sbr.rel (%p65) target = $region35
            $region32: #{_lambda_.7} parent=27 // loop_body
              _
            $region33: #{_lambda_.7} parent=27 // loop_footer
              %s68 = sadd.s32 1, %s64
            $region34: #{_lambda_.7} parent=27 // loop_footer_branch
              %63 = sbr.rel target = $region30
            $region35: #{_lambda_.7} parent=27 // loop_exit
              _
            loop: start=0, step=1, limit=1
            $region36: #{_lambda_.7} parent=27 // loop_pre_header
              _
            $region37: #{_lambda_.7} parent=27 // loop_header
              %s73 = sphi 0, %s77
              %p74 = scmp.ge.s32.totalorder %s73, 1
              %s78 = sphi %s13, %s13
              %s79 = sphi [#allocation2], [#allocation2]
            $region38: #{_lambda_.7} parent=27 // loop_header_branch
              %76 = sbr.rel (%p74) target = $region42
            $region39: #{_lambda_.7} parent=27 // loop_body
              %v80 = vld [vmem:[%s78] sm:$0xf]
              %81 = vst [vmem:[%s79] sm:$0xf] %v80
              %v82 = vld [vmem:[%s78 + $0x8] sm:$0xf]
              %83 = vst [vmem:[%s79 + $0x4] sm:$0xf] %v82
              %v84 = vld [vmem:[%s78 + $0x10] sm:$0xf]
              %85 = vst [vmem:[%s79 + $0x8] sm:$0xf] %v84
              %v86 = vld [vmem:[%s78 + $0x18] sm:$0xf]
              %87 = vst [vmem:[%s79 + $0xc] sm:$0xf] %v86
              %v88 = vld [vmem:[%s78 + $0x20] sm:$0xf]
              %89 = vst [vmem:[%s79 + $0x10] sm:$0xf] %v88
              %v90 = vld [vmem:[%s78 + $0x28] sm:$0xf]
              %91 = vst [vmem:[%s79 + $0x14] sm:$0xf] %v90
              %v92 = vld [vmem:[%s78 + $0x30] sm:$0xf]
              %93 = vst [vmem:[%s79 + $0x18] sm:$0xf] %v92
              %v94 = vld [vmem:[%s78 + $0x38] sm:$0xf]
              %95 = vst [vmem:[%s79 + $0x1c] sm:$0xf] %v94
              %v96 = vld [vmem:[%s78 + $0x40] sm:$0xf]
              %97 = vst [vmem:[%s79 + $0x20] sm:$0xf] %v96
              %v98 = vld [vmem:[%s78 + $0x48] sm:$0xf]
              %99 = vst [vmem:[%s79 + $0x24] sm:$0xf] %v98
              %v100 = vld [vmem:[%s78 + $0x50] sm:$0xf]
              %101 = vst [vmem:[%s79 + $0x28] sm:$0xf] %v100
              %v102 = vld [vmem:[%s78 + $0x58] sm:$0xf]
              %103 = vst [vmem:[%s79 + $0x2c] sm:$0xf] %v102
              %v104 = vld [vmem:[%s78 + $0x60] sm:$0xf]
              %105 = vst [vmem:[%s79 + $0x30] sm:$0xf] %v104
              %v106 = vld [vmem:[%s78 + $0x68] sm:$0xf]
              %107 = vst [vmem:[%s79 + $0x34] sm:$0xf] %v106
              %v108 = vld [vmem:[%s78 + $0x70] sm:$0xf]
              %109 = vst [vmem:[%s79 + $0x38] sm:$0xf] %v108
              %v110 = vld [vmem:[%s78 + $0x78] sm:$0xf]
              %111 = vst [vmem:[%s79 + $0x3c] sm:$0xf] %v110
            $region40: #{_lambda_.7} parent=27 // loop_footer
              %s77 = sadd.s32 1, %s73
            $region41: #{_lambda_.7} parent=27 // loop_footer_branch
              %72 = sbr.rel target = $region37
            $region42: #{_lambda_.7} parent=27 // loop_exit
              _
          $region28: #{_lambda_.7} parent=12 // pred_fallthru
            _
        $region13: #{_lambda_.7} parent=8 // pred_fallthru
          _
        // Predicated region
        $region14: #{_lambda_.7} parent=8 // pred_check
          _
        $region15: #{_lambda_.7} parent=8 // pred_check_branch
          %19 = sbr.rel (0) target = $region17
        $region16: #{_lambda_.7} parent=8 // pred_region
          loop: start=0, step=1, limit=1
          $region18: #{_lambda_.7} parent=16 // loop_pre_header
            _
          $region19: #{_lambda_.7} parent=16 // loop_header
            %s22 = sphi 0, %s26
            %p23 = scmp.ge.s32.totalorder %s22, 1
            %s27 = sphi %s13, %s13
            %s28 = sphi [#allocation2], [#allocation2]
          $region20: #{_lambda_.7} parent=16 // loop_header_branch
            %25 = sbr.rel (%p23) target = $region24
          $region21: #{_lambda_.7} parent=16 // loop_body
            %v29 = vld [vmem:[%s27] sm:$0xf]
            %30 = vst [vmem:[%s28] sm:$0xf] %v29
            %v31 = vld [vmem:[%s27 + $0x8] sm:$0xf]
            %32 = vst [vmem:[%s28 + $0x4] sm:$0xf] %v31
            %v33 = vld [vmem:[%s27 + $0x10] sm:$0xf]
            %34 = vst [vmem:[%s28 + $0x8] sm:$0xf] %v33
            %v35 = vld [vmem:[%s27 + $0x18] sm:$0xf]
            %36 = vst [vmem:[%s28 + $0xc] sm:$0xf] %v35
            %v37 = vld [vmem:[%s27 + $0x20] sm:$0xf]
            %38 = vst [vmem:[%s28 + $0x10] sm:$0xf] %v37
            %v39 = vld [vmem:[%s27 + $0x28] sm:$0xf]
            %40 = vst [vmem:[%s28 + $0x14] sm:$0xf] %v39
            %v41 = vld [vmem:[%s27 + $0x30] sm:$0xf]
            %42 = vst [vmem:[%s28 + $0x18] sm:$0xf] %v41
            %v43 = vld [vmem:[%s27 + $0x38] sm:$0xf]
            %44 = vst [vmem:[%s28 + $0x1c] sm:$0xf] %v43
            %v45 = vld [vmem:[%s27 + $0x40] sm:$0xf]
            %46 = vst [vmem:[%s28 + $0x20] sm:$0xf] %v45
            %v47 = vld [vmem:[%s27 + $0x48] sm:$0xf]
            %48 = vst [vmem:[%s28 + $0x24] sm:$0xf] %v47
            %v49 = vld [vmem:[%s27 + $0x50] sm:$0xf]
            %50 = vst [vmem:[%s28 + $0x28] sm:$0xf] %v49
            %v51 = vld [vmem:[%s27 + $0x58] sm:$0xf]
            %52 = vst [vmem:[%s28 + $0x2c] sm:$0xf] %v51
            %v53 = vld [vmem:[%s27 + $0x60] sm:$0xf]
            %54 = vst [vmem:[%s28 + $0x30] sm:$0xf] %v53
            %v55 = vld [vmem:[%s27 + $0x68] sm:$0xf]
            %56 = vst [vmem:[%s28 + $0x34] sm:$0xf] %v55
            %v57 = vld [vmem:[%s27 + $0x70] sm:$0xf]
            %58 = vst [vmem:[%s28 + $0x38] sm:$0xf] %v57
            %v59 = vld [vmem:[%s27 + $0x78] sm:$0xf]
            %60 = vst [vmem:[%s28 + $0x3c] sm:$0xf] %v59
          $region22: #{_lambda_.7} parent=16 // loop_footer
            %s26 = sadd.s32 1, %s22
          $region23: #{_lambda_.7} parent=16 // loop_footer_branch
            %21 = sbr.rel target = $region19
          $region24: #{_lambda_.7} parent=16 // loop_exit
            _
        $region17: #{_lambda_.7} parent=8 // pred_fallthru
          _
      $region9: #{_lambda_.7} parent=4 // pred_fallthru
        _
      %112 = vnop
    $region5: #{_lambda_.7} parent=1 // pred_fallthru
      _
    // Predicated region
    $region43: #{_lambda_.7} parent=1 // pred_check
      _
    $region44: #{_lambda_.7} parent=1 // pred_check_branch
      %114 = sbr.rel (0) target = $region46
    $region45: #{_lambda_.7} parent=1 // pred_region
      _
    $region46: #{_lambda_.7} parent=1 // pred_fallthru
      _
    // Predicated region
    $region47: #{_lambda_.7} parent=1 // pred_check
      _
    $region48: #{_lambda_.7} parent=1 // pred_check_branch
      %116 = sbr.rel (0) target = $region50
    $region49: #{_lambda_.7} parent=1 // pred_region
      _
    $region50: #{_lambda_.7} parent=1 // pred_fallthru
      _
    // Predicated region
    $region51: #{_lambda_.7} parent=1 // pred_check
      _
    $region52: #{_lambda_.7} parent=1 // pred_check_branch
      %118 = sbr.rel (0) target = $region54
    $region53: #{_lambda_.7} parent=1 // pred_region
      _
    $region54: #{_lambda_.7} parent=1 // pred_fallthru
      _
    // Predicated region
    $region55: #{_lambda_.7} parent=1 // pred_check
      _
    $region56: #{_lambda_.7} parent=1 // pred_check_branch
      %120 = sbr.rel (0) target = $region58
    $region57: #{_lambda_.7} parent=1 // pred_region
      _
    $region58: #{_lambda_.7} parent=1 // pred_fallthru
      _
    // Predicated region
    $region59: #{_lambda_.7} parent=1 // pred_check
      _
    $region60: #{_lambda_.7} parent=1 // pred_check_branch
      %122 = sbr.rel (0) target = $region62
    $region61: #{_lambda_.7} parent=1 // pred_region
      _
    $region62: #{_lambda_.7} parent=1 // pred_fallthru
      _
    // Predicated region
    $region63: #{_lambda_.7} parent=1 // pred_check
      _
    $region64: #{_lambda_.7} parent=1 // pred_check_branch
      %124 = sbr.rel (0) target = $region66
    $region65: #{_lambda_.7} parent=1 // pred_region
      _
    $region66: #{_lambda_.7} parent=1 // pred_fallthru
      _
    %v125 = vld [vmem:[#allocation2] sm:$0xf]
    %v126 = vld [vmem:[#allocation2 + $0x4] sm:$0xf]
    %v127 = vld [vmem:[#allocation2 + $0x8] sm:$0xf]
    %v128 = vld [vmem:[#allocation2 + $0xc] sm:$0xf]
    %v129 = vld [vmem:[#allocation2 + $0x10] sm:$0xf]
    %v130 = vld [vmem:[#allocation2 + $0x14] sm:$0xf]
    %v131 = vld [vmem:[#allocation2 + $0x18] sm:$0xf]
    %v132 = vld [vmem:[#allocation2 + $0x1c] sm:$0xf]
    %v133 = vld [vmem:[#allocation2 + $0x20] sm:$0xf]
    %v134 = vld [vmem:[#allocation2 + $0x24] sm:$0xf]
    %v135 = vld [vmem:[#allocation2 + $0x28] sm:$0xf]
    %v136 = vld [vmem:[#allocation2 + $0x2c] sm:$0xf]
    %v137 = vld [vmem:[#allocation2 + $0x30] sm:$0xf]
    %v138 = vld [vmem:[#allocation2 + $0x34] sm:$0xf]
    %v139 = vld [vmem:[#allocation2 + $0x38] sm:$0xf]
    %v140 = vld [vmem:[#allocation2 + $0x3c] sm:$0xf]
    %v141 = vunpack.c.l.bf16 %v125
    %v142 = vunpack.c.l.bf16 %v126
    %v143 = vunpack.c.l.bf16 %v127
    %v144 = vunpack.c.l.bf16 %v128
    %v145 = vunpack.c.l.bf16 %v129
    %v146 = vunpack.c.l.bf16 %v130
    %v147 = vunpack.c.l.bf16 %v131
    %v148 = vunpack.c.l.bf16 %v132
    %v149 = vunpack.c.l.bf16 %v133
    %v150 = vunpack.c.l.bf16 %v134
    %v151 = vunpack.c.l.bf16 %v135
    %v152 = vunpack.c.l.bf16 %v136
    %v153 = vunpack.c.l.bf16 %v137
    %v154 = vunpack.c.l.bf16 %v138
    %v155 = vunpack.c.l.bf16 %v139
    %v156 = vunpack.c.l.bf16 %v140
    %v157 = vld [vmem:[%s1] sm:$0x1]
    %v159 = vlaneseq
    %v160 = vshrl.u32 %v159, 7
    %v161 = vsub.s32 0, %v160
    %v162 = vrot.slane %v157, %v161
    %v164 = vmul.f32 %v141, %v162
    %v165 = vmul.f32 %v142, %v162
    %v166 = vmul.f32 %v143, %v162
    %v167 = vmul.f32 %v144, %v162
    %v168 = vmul.f32 %v145, %v162
    %v169 = vmul.f32 %v146, %v162
    %v170 = vmul.f32 %v147, %v162
    %v171 = vmul.f32 %v148, %v162
    %v172 = vmul.f32 %v149, %v162
    %v173 = vmul.f32 %v150, %v162
    %v174 = vmul.f32 %v151, %v162
    %v175 = vmul.f32 %v152, %v162
    %v176 = vmul.f32 %v153, %v162
    %v177 = vmul.f32 %v154, %v162
    %v178 = vmul.f32 %v155, %v162
    %v179 = vmul.f32 %v156, %v162
    %v180 = vld [vmem:[%s2] sm:$0x1]
    %v182 = vlaneseq
    %v183 = vshrl.u32 %v182, 7
    %v184 = vsub.s32 0, %v183
    %v185 = vrot.slane %v180, %v184
    %v187 = vadd.f32 %v164, %v185
    %v188 = vadd.f32 %v165, %v185
    %v189 = vadd.f32 %v166, %v185
    %v190 = vadd.f32 %v167, %v185
    %v191 = vadd.f32 %v168, %v185
    %v192 = vadd.f32 %v169, %v185
    %v193 = vadd.f32 %v170, %v185
    %v194 = vadd.f32 %v171, %v185
    %v195 = vadd.f32 %v172, %v185
    %v196 = vadd.f32 %v173, %v185
    %v197 = vadd.f32 %v174, %v185
    %v198 = vadd.f32 %v175, %v185
    %v199 = vadd.f32 %v176, %v185
    %v200 = vadd.f32 %v177, %v185
    %v201 = vadd.f32 %v178, %v185
    %v202 = vadd.f32 %v179, %v185
    %v203 = vld [vmem:[%s3] sm:$0xf]
    %v204 = vld [vmem:[%s3 + $0x4] sm:$0xf]
    %v205 = vld [vmem:[%s3 + $0x8] sm:$0xf]
    %v206 = vld [vmem:[%s3 + $0xc] sm:$0xf]
    %v207 = vld [vmem:[%s3 + $0x10] sm:$0xf]
    %v208 = vld [vmem:[%s3 + $0x14] sm:$0xf]
    %v209 = vld [vmem:[%s3 + $0x18] sm:$0xf]
    %v210 = vld [vmem:[%s3 + $0x1c] sm:$0xf]
    %v211 = vld [vmem:[%s3 + $0x20] sm:$0xf]
    %v212 = vld [vmem:[%s3 + $0x24] sm:$0xf]
    %v213 = vld [vmem:[%s3 + $0x28] sm:$0xf]
    %v214 = vld [vmem:[%s3 + $0x2c] sm:$0xf]
    %v215 = vld [vmem:[%s3 + $0x30] sm:$0xf]
    %v216 = vld [vmem:[%s3 + $0x34] sm:$0xf]
    %v217 = vld [vmem:[%s3 + $0x38] sm:$0xf]
    %v218 = vld [vmem:[%s3 + $0x3c] sm:$0xf]
    %v219 = vunpack.c.l.bf16 %v203
    %v220 = vunpack.c.l.bf16 %v204
    %v221 = vunpack.c.l.bf16 %v205
    %v222 = vunpack.c.l.bf16 %v206
    %v223 = vunpack.c.l.bf16 %v207
    %v224 = vunpack.c.l.bf16 %v208
    %v225 = vunpack.c.l.bf16 %v209
    %v226 = vunpack.c.l.bf16 %v210
    %v227 = vunpack.c.l.bf16 %v211
    %v228 = vunpack.c.l.bf16 %v212
    %v229 = vunpack.c.l.bf16 %v213
    %v230 = vunpack.c.l.bf16 %v214
    %v231 = vunpack.c.l.bf16 %v215
    %v232 = vunpack.c.l.bf16 %v216
    %v233 = vunpack.c.l.bf16 %v217
    %v234 = vunpack.c.l.bf16 %v218
    %v235 = vld [vmem:[%s4] sm:$0x1]
    %v237 = vlaneseq
    %v238 = vshrl.u32 %v237, 7
    %v239 = vsub.s32 0, %v238
    %v240 = vrot.slane %v235, %v239
    %v242 = vmul.f32 %v219, %v240
    %v243 = vmul.f32 %v220, %v240
    %v244 = vmul.f32 %v221, %v240
    %v245 = vmul.f32 %v222, %v240
    %v246 = vmul.f32 %v223, %v240
    %v247 = vmul.f32 %v224, %v240
    %v248 = vmul.f32 %v225, %v240
    %v249 = vmul.f32 %v226, %v240
    %v250 = vmul.f32 %v227, %v240
    %v251 = vmul.f32 %v228, %v240
    %v252 = vmul.f32 %v229, %v240
    %v253 = vmul.f32 %v230, %v240
    %v254 = vmul.f32 %v231, %v240
    %v255 = vmul.f32 %v232, %v240
    %v256 = vmul.f32 %v233, %v240
    %v257 = vmul.f32 %v234, %v240
    %v258 = vld [vmem:[%s5] sm:$0x1]
    %v260 = vlaneseq
    %v261 = vshrl.u32 %v260, 7
    %v262 = vsub.s32 0, %v261
    %v263 = vrot.slane %v258, %v262
    %v265 = vadd.f32 %v242, %v263
    %v266 = vadd.f32 %v243, %v263
    %v267 = vadd.f32 %v244, %v263
    %v268 = vadd.f32 %v245, %v263
    %v269 = vadd.f32 %v246, %v263
    %v270 = vadd.f32 %v247, %v263
    %v271 = vadd.f32 %v248, %v263
    %v272 = vadd.f32 %v249, %v263
    %v273 = vadd.f32 %v250, %v263
    %v274 = vadd.f32 %v251, %v263
    %v275 = vadd.f32 %v252, %v263
    %v276 = vadd.f32 %v253, %v263
    %v277 = vadd.f32 %v254, %v263
    %v278 = vadd.f32 %v255, %v263
    %v279 = vadd.f32 %v256, %v263
    %v280 = vadd.f32 %v257, %v263
    %v281 = vadd.f32 %v187, %v265
    %v282 = vadd.f32 %v188, %v266
    %v283 = vadd.f32 %v189, %v267
    %v284 = vadd.f32 %v190, %v268
    %v285 = vadd.f32 %v191, %v269
    %v286 = vadd.f32 %v192, %v270
    %v287 = vadd.f32 %v193, %v271
    %v288 = vadd.f32 %v194, %v272
    %v289 = vadd.f32 %v195, %v273
    %v290 = vadd.f32 %v196, %v274
    %v291 = vadd.f32 %v197, %v275
    %v292 = vadd.f32 %v198, %v276
    %v293 = vadd.f32 %v199, %v277
    %v294 = vadd.f32 %v200, %v278
    %v295 = vadd.f32 %v201, %v279
    %v296 = vadd.f32 %v202, %v280
    %v297 = vsub.f32 0.0, %v281
    %v298 = vsub.f32 0.0, %v282
    %v299 = vsub.f32 0.0, %v283
    %v300 = vsub.f32 0.0, %v284
    %v301 = vsub.f32 0.0, %v285
    %v302 = vsub.f32 0.0, %v286
    %v303 = vsub.f32 0.0, %v287
    %v304 = vsub.f32 0.0, %v288
    %v305 = vsub.f32 0.0, %v289
    %v306 = vsub.f32 0.0, %v290
    %v307 = vsub.f32 0.0, %v291
    %v308 = vsub.f32 0.0, %v292
    %v309 = vsub.f32 0.0, %v293
    %v310 = vsub.f32 0.0, %v294
    %v311 = vsub.f32 0.0, %v295
    %v312 = vsub.f32 0.0, %v296
    %v313 = vmul.f32 %v297, 1.442695
    %v314 = vpow.pop %v313
    %v315 = vmul.f32 %v298, 1.442695
    %v316 = vpow.pop %v315
    %v317 = vmul.f32 %v299, 1.442695
    %v318 = vpow.pop %v317
    %v319 = vmul.f32 %v300, 1.442695
    %v320 = vpow.pop %v319
    %v321 = vmul.f32 %v301, 1.442695
    %v322 = vpow.pop %v321
    %v323 = vmul.f32 %v302, 1.442695
    %v324 = vpow.pop %v323
    %v325 = vmul.f32 %v303, 1.442695
    %v326 = vpow.pop %v325
    %v327 = vmul.f32 %v304, 1.442695
    %v328 = vpow.pop %v327
    %v329 = vmul.f32 %v305, 1.442695
    %v330 = vpow.pop %v329
    %v331 = vmul.f32 %v306, 1.442695
    %v332 = vpow.pop %v331
    %v333 = vmul.f32 %v307, 1.442695
    %v334 = vpow.pop %v333
    %v335 = vmul.f32 %v308, 1.442695
    %v336 = vpow.pop %v335
    %v337 = vmul.f32 %v309, 1.442695
    %v338 = vpow.pop %v337
    %v339 = vmul.f32 %v310, 1.442695
    %v340 = vpow.pop %v339
    %v341 = vmul.f32 %v311, 1.442695
    %v342 = vpow.pop %v341
    %v343 = vmul.f32 %v312, 1.442695
    %v344 = vpow.pop %v343
    %v345 = vadd.f32 %v314, 1.0
    %v346 = vadd.f32 %v316, 1.0
    %v347 = vadd.f32 %v318, 1.0
    %v348 = vadd.f32 %v320, 1.0
    %v349 = vadd.f32 %v322, 1.0
    %v350 = vadd.f32 %v324, 1.0
    %v351 = vadd.f32 %v326, 1.0
    %v352 = vadd.f32 %v328, 1.0
    %v353 = vadd.f32 %v330, 1.0
    %v354 = vadd.f32 %v332, 1.0
    %v355 = vadd.f32 %v334, 1.0
    %v356 = vadd.f32 %v336, 1.0
    %v357 = vadd.f32 %v338, 1.0
    %v358 = vadd.f32 %v340, 1.0
    %v359 = vadd.f32 %v342, 1.0
    %v360 = vadd.f32 %v344, 1.0
    %v361 = vrcp.pop %v345
    %v362 = vrcp.pop %v346
    %v363 = vrcp.pop %v347
    %v364 = vrcp.pop %v348
    %v365 = vrcp.pop %v349
    %v366 = vrcp.pop %v350
    %v367 = vrcp.pop %v351
    %v368 = vrcp.pop %v352
    %v369 = vrcp.pop %v353
    %v370 = vrcp.pop %v354
    %v371 = vrcp.pop %v355
    %v372 = vrcp.pop %v356
    %v373 = vrcp.pop %v357
    %v374 = vrcp.pop %v358
    %v375 = vrcp.pop %v359
    %v376 = vrcp.pop %v360
    %v377 = vmul.f32 %v281, %v361
    %v378 = vmul.f32 %v282, %v362
    %v379 = vmul.f32 %v283, %v363
    %v380 = vmul.f32 %v284, %v364
    %v381 = vmul.f32 %v285, %v365
    %v382 = vmul.f32 %v286, %v366
    %v383 = vmul.f32 %v287, %v367
    %v384 = vmul.f32 %v288, %v368
    %v385 = vmul.f32 %v289, %v369
    %v386 = vmul.f32 %v290, %v370
    %v387 = vmul.f32 %v291, %v371
    %v388 = vmul.f32 %v292, %v372
    %v389 = vmul.f32 %v293, %v373
    %v390 = vmul.f32 %v294, %v374
    %v391 = vmul.f32 %v295, %v375
    %v392 = vmul.f32 %v296, %v376
    %393 = vst [vmem:[%s6] sm:$0xff] %v377
    %394 = vst [vmem:[%s6 + $0x8] sm:$0xff] %v378
    %395 = vst [vmem:[%s6 + $0x10] sm:$0xff] %v379
    %396 = vst [vmem:[%s6 + $0x18] sm:$0xff] %v380
    %397 = vst [vmem:[%s6 + $0x20] sm:$0xff] %v381
    %398 = vst [vmem:[%s6 + $0x28] sm:$0xff] %v382
    %399 = vst [vmem:[%s6 + $0x30] sm:$0xff] %v383
    %400 = vst [vmem:[%s6 + $0x38] sm:$0xff] %v384
    %401 = vst [vmem:[%s6 + $0x40] sm:$0xff] %v385
    %402 = vst [vmem:[%s6 + $0x48] sm:$0xff] %v386
    %403 = vst [vmem:[%s6 + $0x50] sm:$0xff] %v387
    %404 = vst [vmem:[%s6 + $0x58] sm:$0xff] %v388
    %405 = vst [vmem:[%s6 + $0x60] sm:$0xff] %v389
    %406 = vst [vmem:[%s6 + $0x68] sm:$0xff] %v390
    %407 = vst [vmem:[%s6 + $0x70] sm:$0xff] %v391
    %408 = vst [vmem:[%s6 + $0x78] sm:$0xff] %v392
    // Predicated region
    $region67: #{_lambda_.7} parent=1 // pred_check
      _
    $region68: #{_lambda_.7} parent=1 // pred_check_branch
      %410 = sbr.rel (0) target = $region70
    $region69: #{_lambda_.7} parent=1 // pred_region
      _
    $region70: #{_lambda_.7} parent=1 // pred_fallthru
      _
    // Predicated region
    $region71: #{_lambda_.7} parent=1 // pred_check
      _
    $region72: #{_lambda_.7} parent=1 // pred_check_branch
      %412 = sbr.rel (0) target = $region74
    $region73: #{_lambda_.7} parent=1 // pred_region
      _
    $region74: #{_lambda_.7} parent=1 // pred_fallthru
      _

</llo_original>
